<compile_context>
chip_gen: v6e
topology: v6e:2x2x1
jax: 0.10.0
libtpu: 0.0.40
codegen_flags: <defaults>
</compile_context>

<pallas_src>
import functools

import numpy as np
import jax
import jax.numpy as jnp
from jax.experimental import pallas as pl
from jax.experimental.pallas import tpu as pltpu


def _round_up(n, m):
    return ((n + m - 1) // m) * m


# ----------------------------- Pallas kernels -----------------------------

def _frft_branch_kernel(x_ref, mr_ref, mi_ref, ar_ref, ai_ref,
                        mix_ref, bias_ref, o_ref, *, rows_p):
    """Fused FrFT branch.  Rows are (batch*channel) images, lanes are pixels.

    Entirely in VMEM:
        F  = X @ (Mr + i*Mi)                      (forward DFrFT, real input)
        [R1; I1] = Mix @ [Fr; Fi] + bias          (conv_05 as row-mixing)
        Y  = (R1 + i*I1) @ (Ar + i*Ai)            (inverse, Gauss 3-matmul)
        out = |Y|                                  (1/(H*W) folded into Ar/Ai)
    """
    x = x_ref[...]                                            # (rows_p, HW)
    fr = jnp.dot(x, mr_ref[...], preferred_element_type=jnp.float32)
    fi = jnp.dot(x, mi_ref[...], preferred_element_type=jnp.float32)
    stacked = jnp.concatenate([fr, fi], axis=0)               # (2*rows_p, HW)
    mixed = jnp.dot(mix_ref[...], stacked,
                    preferred_element_type=jnp.float32) + bias_ref[...]
    r1 = mixed[:rows_p]
    i1 = mixed[rows_p:]
    ar = ar_ref[...]
    ai = ai_ref[...]
    t1 = jnp.dot(r1, ar, preferred_element_type=jnp.float32)
    t2 = jnp.dot(i1, ai, preferred_element_type=jnp.float32)
    t3 = jnp.dot(r1 + i1, ar + ai, preferred_element_type=jnp.float32)
    yr = t1 - t2
    yi = t3 - t1 - t2
    o_ref[...] = jnp.sqrt(yr * yr + yi * yi)


def _conv3x3_kernel(xp_ref, w9_ref, b_ref, m_ref, o_ref, *, w_dim, hw, batch):
    """3x3 conv (padding=1), batch folded into lanes, one grid step.

    Builds the 9-tap patch matrix (9*Cin_p, B*H*W) in VMEM from the haloed,
    flattened image blocks (static lane slices + boundary masks), then one
    (Cout_p, 9*Cin_p) @ (9*Cin_p, B*H*W) matmul with a lane-dense output.
    """
    xp = xp_ref[...]                                   # (B, Cin_p, HW+2*(W+1))
    taps = []
    for t in range(9):                                 # unrolled, static offsets
        off = (t // 3) * w_dim + (t % 3)
        row = [xp[b, :, off:off + hw] * m_ref[t] for b in range(batch)]
        taps.append(jnp.concatenate(row, axis=1))      # (Cin_p, B*HW)
    patch = jnp.concatenate(taps, axis=0)              # (9*Cin_p, B*HW)
    o_ref[...] = (jnp.dot(w9_ref[...], patch,
                          preferred_element_type=jnp.float32) + b_ref[...])


# ------------------------------ wrappers ----------------------------------

def _pallas_frft_branch(xf, mfr, mfi, ar_s, ai_s, mix, bias, rows_p):
    """xf: (rows, HW) real.  Returns |IFRFT(conv_05(FRFT(xf)))| * 1/HW."""
    rows, hw = xf.shape
    xp = jnp.pad(xf, ((0, rows_p - rows), (0, 0)))
    flops = int(2 * rows_p * hw * hw * 5            # 2 fwd + 3 inverse matmuls
                + 2 * (2 * rows_p) ** 2 * hw        # channel mix
                + 8 * rows_p * hw)                  # epilogue
    bytes_accessed = int(4 * hw * hw * 4 + 3 * rows_p * hw * 4
                         + (2 * rows_p) ** 2 * 4)
    out = pl.pallas_call(
        functools.partial(_frft_branch_kernel, rows_p=rows_p),
        out_shape=jax.ShapeDtypeStruct((rows_p, hw), jnp.float32),
        grid=(1,),
        in_specs=[pl.BlockSpec((rows_p, hw), lambda i: (0, 0)),
                  pl.BlockSpec((hw, hw), lambda i: (0, 0)),
                  pl.BlockSpec((hw, hw), lambda i: (0, 0)),
                  pl.BlockSpec((hw, hw), lambda i: (0, 0)),
                  pl.BlockSpec((hw, hw), lambda i: (0, 0)),
                  pl.BlockSpec((2 * rows_p, 2 * rows_p), lambda i: (0, 0)),
                  pl.BlockSpec((2 * rows_p, 1), lambda i: (0, 0))],
        out_specs=pl.BlockSpec((rows_p, hw), lambda i: (0, 0)),
        compiler_params=pltpu.CompilerParams(
            dimension_semantics=("arbitrary",)),
        cost_estimate=pl.CostEstimate(flops=flops,
                                      transcendentals=int(rows_p * hw),
                                      bytes_accessed=bytes_accessed),
    )(xp, mfr, mfi, ar_s, ai_s, mix, bias)
    return out[:rows]


def _build_conv05_mix(w, b, B, C1, rows_p):
    """conv_05 (1x1 over stacked [Real;Imag] channels) as a left-mult matrix
    acting on the row (batch*channel) axis of the stacked [Fr; Fi] slab."""
    w2 = w.reshape(2 * C1, 2 * C1)
    eye_b = jnp.eye(B, dtype=jnp.float32)
    rows = B * C1
    M = jnp.zeros((2 * rows_p, 2 * rows_p), jnp.float32)
    M = M.at[:rows, :rows].set(jnp.kron(eye_b, w2[:C1, :C1]))
    M = M.at[:rows, rows_p:rows_p + rows].set(jnp.kron(eye_b, w2[:C1, C1:]))
    M = M.at[rows_p:rows_p + rows, :rows].set(jnp.kron(eye_b, w2[C1:, :C1]))
    M = M.at[rows_p:rows_p + rows, rows_p:rows_p + rows].set(
        jnp.kron(eye_b, w2[C1:, C1:]))
    bb = jnp.zeros((2 * rows_p, 1), jnp.float32)
    bb = bb.at[:rows, 0].set(jnp.tile(b[:C1], B))
    bb = bb.at[rows_p:rows_p + rows, 0].set(jnp.tile(b[C1:], B))
    return M, bb


def _conv3x3_masks(H, W):
    hh = np.arange(H * W) // W
    ww = np.arange(H * W) % W
    m = np.zeros((9, 1, H * W), np.float32)
    for t in range(9):
        dh, dw = t // 3 - 1, t % 3 - 1
        ok = (hh + dh >= 0) & (hh + dh < H) & (ww + dw >= 0) & (ww + dw < W)
        m[t, 0] = ok.astype(np.float32)
    return m


def conv3x3(x, w, b):
    """3x3 conv (padding=1) in NCHW, pixels in lanes, batch folded into lanes."""
    B, Cin, H, W = x.shape
    Cout = w.shape[0]
    HW = H * W
    cin_p = _round_up(Cin, 8)
    cout_p = _round_up(Cout, 8)
    # Halo-pad the flattened pixel axis so every tap is a static lane slice;
    # zero-pad channels to a sublane multiple.
    xf = x.reshape(B, Cin, HW)
    xf = jnp.pad(xf, ((0, 0), (0, cin_p - Cin), (W + 1, W + 1)))
    hwp = HW + 2 * (W + 1)
    # (Cout, Cin, 3, 3) -> (Cout_p, 9*cin_p), tap-major, zero-padded channels.
    w9 = jnp.transpose(w.reshape(Cout, Cin, 9), (0, 2, 1))      # (Cout,9,Cin)
    w9 = jnp.pad(w9, ((0, cout_p - Cout), (0, 0), (0, cin_p - Cin)))
    w9 = w9.reshape(cout_p, 9 * cin_p)
    b_p = jnp.pad(b, (0, cout_p - Cout)).reshape(cout_p, 1)
    masks = jnp.asarray(_conv3x3_masks(H, W))
    flops = int(2 * cout_p * 9 * cin_p * B * HW)
    bytes_accessed = int((B * cin_p * hwp + cout_p * 9 * cin_p
                          + cout_p * B * HW + 9 * HW) * 4)
    out = pl.pallas_call(
        functools.partial(_conv3x3_kernel, w_dim=W, hw=HW, batch=B),
        out_shape=jax.ShapeDtypeStruct((cout_p, B * HW), jnp.float32),
        grid=(1,),
        in_specs=[pl.BlockSpec((B, cin_p, hwp), lambda i: (0, 0, 0)),
                  pl.BlockSpec((cout_p, 9 * cin_p), lambda i: (0, 0)),
                  pl.BlockSpec((cout_p, 1), lambda i: (0, 0)),
                  pl.BlockSpec((9, 1, HW), lambda i: (0, 0, 0))],
        out_specs=pl.BlockSpec((cout_p, B * HW), lambda i: (0, 0)),
        compiler_params=pltpu.CompilerParams(
            dimension_semantics=("arbitrary",)),
        cost_estimate=pl.CostEstimate(flops=flops, transcendentals=0,
                                      bytes_accessed=bytes_accessed),
    )(xf, w9, b_p, masks)
    out = out[:Cout].reshape(Cout, B, HW).transpose(1, 0, 2)
    return out.reshape(B, Cout, H, W)


# ----------------------- DFrFT basis (setup, numpy) -----------------------

def _cconvm_np(N, s):
    M = np.zeros((N, N), dtype=np.float64)
    for i in range(N):
        M[:, i] = np.roll(s, i)
    return M


def dis_s_np(N, app_ord=2):
    app_ord = int(app_ord / 2)
    s = np.concatenate([np.array([0.0, 1.0]),
                        np.zeros(N - 1 - 2 * app_ord),
                        np.array([1.0])])
    S = _cconvm_np(N, s) + np.diag(np.fft.fft(s).real)
    p = N
    r = N // 2
    P = np.zeros((p, p))
    P[0, 0] = 1.0
    even = 1 - p % 2
    for i in range(1, r - even + 1):
        P[i, i] = 1.0 / np.sqrt(2.0)
        P[i, p - i] = 1.0 / np.sqrt(2.0)
    if even:
        P[r, r] = 1.0
    for i in range(r + 1, p):
        P[i, i] = -1.0 / np.sqrt(2.0)
        P[i, p - i] = 1.0 / np.sqrt(2.0)
    CS = P @ S @ P.T
    half = int(np.floor(N / 2 + 1))
    C2 = CS[:half, :half]
    S2 = CS[half:, half:]
    ec, vc = np.linalg.eig(C2)
    es, vs = np.linalg.eig(S2)
    ec, vc, es, vs = ec.real, vc.real, es.real, vs.real
    qvc = np.vstack([vc, np.zeros((int(np.ceil(N / 2 - 1)), half))])
    SC2 = P @ qvc
    qvs = np.vstack([np.zeros((half, int(np.ceil(N / 2 - 1)))), vs])
    SS2 = P @ qvs
    SC2 = SC2[:, np.argsort(-ec)]
    SS2 = SS2[:, np.argsort(-es)]
    if N % 2 == 0:
        S2C2 = np.zeros((N, N + 1))
        SS2 = np.hstack([SS2, np.zeros((SS2.shape[0], 1))])
        S2C2[:, 0:N + 1:2] = SC2
        S2C2[:, 1:N:2] = SS2
        S2C2 = np.delete(S2C2, N - 1, axis=1)
    else:
        S2C2 = np.zeros((N, N))
        S2C2[:, 0:N + 1:2] = SC2
        S2C2[:, 1:N:2] = SS2
    return S2C2.astype(np.float32)


def _dfrt_matrix_c(N, Evec_np, a):
    """F = sqrt(N) * Evec @ diag(exp(-i*pi/2*a*l)) @ Evec.T  (complex64)."""
    even = 1 - N % 2
    l = jnp.asarray(list(range(0, N - 1)) + [N - 1 + even], dtype=jnp.float32)
    ev = jnp.asarray(Evec_np, dtype=jnp.complex64)
    f = jnp.exp(-1j * (np.pi / 2.0) * a * l)
    return (N ** 0.5) * ((ev * f[None, :]) @ ev.T)


def frft_kron_operator(H, W, Evec_H, Evec_W, a):
    """Right-multiplication operator for the flattened 2-D DFrFT.

    Folds both fftshift calls of FRFT2D into the basis matrices, then collapses
    Y = Hs @ X @ Ws into vec(Y) = vec(X) @ MT (valid for even H, W).
    Returns (real, imag) of MT as float32 (H*W, H*W) matrices.
    """
    Hm = _dfrt_matrix_c(H, Evec_H, a)
    Wm = _dfrt_matrix_c(W, Evec_W, a)
    sH, sW = H // 2, W // 2
    Hs = jnp.roll(Hm, shift=(sH, -sH), axis=(0, 1))   # fftshift folded (row op)
    Ws = jnp.roll(Wm, shift=(-sW, sW), axis=(0, 1))   # fftshift folded (col op)
    mt = jnp.einsum('hk,lw->klhw', Hs, Ws).reshape(H * W, H * W)
    return jnp.real(mt).astype(jnp.float32), jnp.imag(mt).astype(jnp.float32)


# ------------------------------- forward ---------------------------------

def frft_forward(x, params, Evec_H, Evec_W):
    B, C, H, W = x.shape
    HW = H * W
    C0 = int(C / 3)
    C1 = C - 2 * C0
    x_0 = x[:, 0:C0]
    x_05 = x[:, C0:C - C0]
    x_1 = x[:, C - C0:C]

    # branch 0: plain 3x3 conv (Pallas, batch folded into lanes)
    y0 = conv3x3(x_0, params["conv_0_w"], params["conv_0_b"])

    # branch 0.5: fully fused FrFT branch (forward + conv_05 + inverse + |.|)
    order = params["order"][0]
    mfr, mfi = frft_kron_operator(H, W, Evec_H, Evec_W, order)
    air, aii = frft_kron_operator(H, W, Evec_H, Evec_W, -order)
    inv_scale = 1.0 / float(HW)
    ar_s = air * inv_scale            # fold |.|/(H*W) into the inverse operator
    ai_s = aii * inv_scale
    rows = B * C1
    rows_p = max(8, _round_up(rows, 8))
    mix, bias = _build_conv05_mix(params["conv_05_w"], params["conv_05_b"],
                                  B, C1, rows_p)
    xf = x_05.reshape(rows, HW)
    mag = _pallas_frft_branch(xf, mfr, mfi, ar_s, ai_s, mix, bias, rows_p)
    ifrft = mag.reshape(B, C1, H, W)

    # branch 1: rfft2 / tiny 1x1 complex channel mix / irfft2 in plain XLA
    # (Cc = C0 = 1 and 144-lane blocks would be masked-store bound in Pallas).
    # TODO(synk): rfft2/irfft2 have no Pallas primitive; kept in plain JAX.
    fre = jnp.fft.rfft2(x_1)                           # (B, C0, H, W//2+1)
    stacked = jnp.concatenate([jnp.real(fre), jnp.imag(fre)], axis=1)
    w1 = params["conv_1_w"].reshape(2 * C0, 2 * C0)
    mixed = (jnp.einsum('oi,bihw->bohw', w1, stacked)
             + params["conv_1_b"][None, :, None, None])
    fre_out = jax.lax.complex(mixed[:, :C0], mixed[:, C0:])
    x1_out = jnp.fft.irfft2(fre_out, s=(H, W))         # norm='backward'

    out = jnp.concatenate([y0, ifrft, x1_out], axis=1)
    out = conv3x3(out, params["conv2_w"], params["conv2_b"])
    return out


# ------------------------------ init & main -------------------------------

def _conv_init(key, cout, cin, k):
    fan_in = cin * k * k
    bound = 1.0 / np.sqrt(fan_in)
    kw, kb = jax.random.split(key)
    w = jax.random.uniform(kw, (cout, cin, k, k), jnp.float32, -bound, bound)
    b = jax.random.uniform(kb, (cout,), jnp.float32, -bound, bound)
    return w, b


if __name__ == "__main__":
    B, C, H, W = 2, 4, 16, 16
    C0 = int(C / 3)
    C1 = C - 2 * C0

    key = jax.random.PRNGKey(0)
    k_x, k0, k05, k1, k2, k_ord = jax.random.split(key, 6)
    x = jax.random.normal(k_x, (B, C, H, W), jnp.float32)

    w0, b0 = _conv_init(k0, C0, C0, 3)
    w05, b05 = _conv_init(k05, 2 * C1, 2 * C1, 1)
    w1, b1 = _conv_init(k1, 2 * C0, 2 * C0, 1)
    w2, b2 = _conv_init(k2, C, C, 3)
    params = {
        "conv_0_w": w0, "conv_0_b": b0,
        "conv_05_w": w05, "conv_05_b": b05,
        "conv_1_w": w1, "conv_1_b": b1,
        "conv2_w": w2, "conv2_b": b2,
        "order": jax.random.normal(k_ord, (1,), jnp.float32),
    }

    Evec_H = dis_s_np(H)
    Evec_W = dis_s_np(W)

    fwd = jax.jit(lambda xx, pp: frft_forward(xx, pp, Evec_H, Evec_W))
    out = jax.block_until_ready(fwd(x, params))
    assert out.shape == (B, C, H, W) and out.dtype == jnp.float32
    assert bool(jnp.all(jnp.isfinite(out)))
    print("KERNEL_OK")
</pallas_src>

<mosaic_0001>
module attributes {stable_mosaic.version = 11 : i64} {
  func.func @_frft_branch_kernel(%arg0: i32, %arg1: memref<8x256xf32, #tpu.memory_space<vmem>>, %arg2: memref<256x256xf32, #tpu.memory_space<vmem>>, %arg3: memref<256x256xf32, #tpu.memory_space<vmem>>, %arg4: memref<256x256xf32, #tpu.memory_space<vmem>>, %arg5: memref<256x256xf32, #tpu.memory_space<vmem>>, %arg6: memref<16x16xf32, #tpu.memory_space<vmem>>, %arg7: memref<16x1xf32, #tpu.memory_space<vmem>>, %arg8: memref<8x256xf32, #tpu.memory_space<vmem>>) attributes {dimension_semantics = [#tpu.dimension_semantics<arbitrary>], iteration_bounds = array<i64: 1>, scalar_prefetch = 0 : i64, scratch_operands = 0 : i64, tpu.core_type = #tpu.core_type<tc>, window_params = [{pipeline_mode = #tpu.pipeline_mode<synchronous>, transform_indices = @transform_0, window_bounds = array<i64: 8, 256>}, {pipeline_mode = #tpu.pipeline_mode<synchronous>, transform_indices = @transform_1, window_bounds = array<i64: 256, 256>}, {pipeline_mode = #tpu.pipeline_mode<synchronous>, transform_indices = @transform_2, window_bounds = array<i64: 256, 256>}, {pipeline_mode = #tpu.pipeline_mode<synchronous>, transform_indices = @transform_3, window_bounds = array<i64: 256, 256>}, {pipeline_mode = #tpu.pipeline_mode<synchronous>, transform_indices = @transform_4, window_bounds = array<i64: 256, 256>}, {pipeline_mode = #tpu.pipeline_mode<synchronous>, transform_indices = @transform_5, window_bounds = array<i64: 16, 16>}, {pipeline_mode = #tpu.pipeline_mode<synchronous>, transform_indices = @transform_6, window_bounds = array<i64: 16, 1>}, {pipeline_mode = #tpu.pipeline_mode<synchronous>, transform_indices = @transform_7, window_bounds = array<i64: 8, 256>}]} {
    %c0 = arith.constant 0 : index
    %c0_0 = arith.constant 0 : index
    %0 = vector.load %arg1[%c0, %c0_0] : memref<8x256xf32, #tpu.memory_space<vmem>>, vector<8x256xf32>
    %c0_1 = arith.constant 0 : index
    %c0_2 = arith.constant 0 : index
    %1 = vector.load %arg2[%c0_1, %c0_2] : memref<256x256xf32, #tpu.memory_space<vmem>>, vector<256x256xf32>
    %cst = arith.constant dense<0.000000e+00> : vector<8x256xf32>
    %2 = tpu.matmul %0, %1, %cst {dimension_numbers = #tpu.dot_dimension_numbers<[1], [0], [0], [1], [0, 0, 1, 1], [], []>} : vector<8x256xf32>, vector<256x256xf32>, vector<8x256xf32> -> vector<8x256xf32>
    %c0_3 = arith.constant 0 : index
    %c0_4 = arith.constant 0 : index
    %3 = vector.load %arg3[%c0_3, %c0_4] : memref<256x256xf32, #tpu.memory_space<vmem>>, vector<256x256xf32>
    %cst_5 = arith.constant dense<0.000000e+00> : vector<8x256xf32>
    %4 = tpu.matmul %0, %3, %cst_5 {dimension_numbers = #tpu.dot_dimension_numbers<[1], [0], [0], [1], [0, 0, 1, 1], [], []>} : vector<8x256xf32>, vector<256x256xf32>, vector<8x256xf32> -> vector<8x256xf32>
    %5 = tpu.concatenate %2, %4 in 0 : vector<8x256xf32>, vector<8x256xf32> -> vector<16x256xf32>
    %c0_6 = arith.constant 0 : index
    %c0_7 = arith.constant 0 : index
    %6 = vector.load %arg6[%c0_6, %c0_7] : memref<16x16xf32, #tpu.memory_space<vmem>>, vector<16x16xf32>
    %cst_8 = arith.constant dense<0.000000e+00> : vector<16x256xf32>
    %7 = tpu.matmul %6, %5, %cst_8 {dimension_numbers = #tpu.dot_dimension_numbers<[1], [0], [0], [1], [0, 0, 1, 1], [], []>} : vector<16x16xf32>, vector<16x256xf32>, vector<16x256xf32> -> vector<16x256xf32>
    %c0_9 = arith.constant 0 : index
    %c0_10 = arith.constant 0 : index
    %8 = vector.load %arg7[%c0_9, %c0_10] : memref<16x1xf32, #tpu.memory_space<vmem>>, vector<16x1xf32>
    %9 = vector.broadcast %8 : vector<16x1xf32> to vector<16x256xf32>
    %10 = arith.addf %7, %9 : vector<16x256xf32>
    %11 = vector.extract_strided_slice %10 {offsets = [0, 0], sizes = [8, 256], strides = [1, 1]} : vector<16x256xf32> to vector<8x256xf32>
    %12 = vector.extract_strided_slice %10 {offsets = [8, 0], sizes = [8, 256], strides = [1, 1]} : vector<16x256xf32> to vector<8x256xf32>
    %c0_11 = arith.constant 0 : index
    %c0_12 = arith.constant 0 : index
    %13 = vector.load %arg4[%c0_11, %c0_12] : memref<256x256xf32, #tpu.memory_space<vmem>>, vector<256x256xf32>
    %c0_13 = arith.constant 0 : index
    %c0_14 = arith.constant 0 : index
    %14 = vector.load %arg5[%c0_13, %c0_14] : memref<256x256xf32, #tpu.memory_space<vmem>>, vector<256x256xf32>
    %cst_15 = arith.constant dense<0.000000e+00> : vector<8x256xf32>
    %15 = tpu.matmul %11, %13, %cst_15 {dimension_numbers = #tpu.dot_dimension_numbers<[1], [0], [0], [1], [0, 0, 1, 1], [], []>} : vector<8x256xf32>, vector<256x256xf32>, vector<8x256xf32> -> vector<8x256xf32>
    %cst_16 = arith.constant dense<0.000000e+00> : vector<8x256xf32>
    %16 = tpu.matmul %12, %14, %cst_16 {dimension_numbers = #tpu.dot_dimension_numbers<[1], [0], [0], [1], [0, 0, 1, 1], [], []>} : vector<8x256xf32>, vector<256x256xf32>, vector<8x256xf32> -> vector<8x256xf32>
    %17 = arith.addf %11, %12 : vector<8x256xf32>
    %18 = arith.addf %13, %14 : vector<256x256xf32>
    %cst_17 = arith.constant dense<0.000000e+00> : vector<8x256xf32>
    %19 = tpu.matmul %17, %18, %cst_17 {dimension_numbers = #tpu.dot_dimension_numbers<[1], [0], [0], [1], [0, 0, 1, 1], [], []>} : vector<8x256xf32>, vector<256x256xf32>, vector<8x256xf32> -> vector<8x256xf32>
    %20 = arith.subf %15, %16 : vector<8x256xf32>
    %21 = arith.subf %19, %15 : vector<8x256xf32>
    %22 = arith.subf %21, %16 : vector<8x256xf32>
    %23 = arith.mulf %20, %20 : vector<8x256xf32>
    %24 = arith.mulf %22, %22 : vector<8x256xf32>
    %25 = arith.addf %23, %24 : vector<8x256xf32>
    %26 = math.sqrt %25 : vector<8x256xf32>
    %c0_18 = arith.constant 0 : index
    %c0_19 = arith.constant 0 : index
    %27 = vector.load %arg8[%c0_18, %c0_19] : memref<8x256xf32, #tpu.memory_space<vmem>>, vector<8x256xf32>
    tpu.vector_store %arg8[%c0_18, %c0_19], %26 {strides = array<i32>} : memref<8x256xf32, #tpu.memory_space<vmem>>, vector<8x256xf32>,
    return
  }
  func.func @transform_0(%arg0: i32) -> (i32, i32) {
    %c0_i32 = arith.constant 0 : i32
    %c0_i32_0 = arith.constant 0 : i32
    %c0_i32_1 = arith.constant 0 : i32
    return %c0_i32, %c0_i32_0 : i32, i32
  }
  func.func @transform_1(%arg0: i32) -> (i32, i32) {
    %c0_i32 = arith.constant 0 : i32
    %c0_i32_0 = arith.constant 0 : i32
    %c0_i32_1 = arith.constant 0 : i32
    return %c0_i32, %c0_i32_0 : i32, i32
  }
  func.func @transform_2(%arg0: i32) -> (i32, i32) {
    %c0_i32 = arith.constant 0 : i32
    %c0_i32_0 = arith.constant 0 : i32
    %c0_i32_1 = arith.constant 0 : i32
    return %c0_i32, %c0_i32_0 : i32, i32
  }
  func.func @transform_3(%arg0: i32) -> (i32, i32) {
    %c0_i32 = arith.constant 0 : i32
    %c0_i32_0 = arith.constant 0 : i32
    %c0_i32_1 = arith.constant 0 : i32
    return %c0_i32, %c0_i32_0 : i32, i32
  }
  func.func @transform_4(%arg0: i32) -> (i32, i32) {
    %c0_i32 = arith.constant 0 : i32
    %c0_i32_0 = arith.constant 0 : i32
    %c0_i32_1 = arith.constant 0 : i32
    return %c0_i32, %c0_i32_0 : i32, i32
  }
  func.func @transform_5(%arg0: i32) -> (i32, i32) {
    %c0_i32 = arith.constant 0 : i32
    %c0_i32_0 = arith.constant 0 : i32
    %c0_i32_1 = arith.constant 0 : i32
    return %c0_i32, %c0_i32_0 : i32, i32
  }
  func.func @transform_6(%arg0: i32) -> (i32, i32) {
    %c0_i32 = arith.constant 0 : i32
    %c0_i32_0 = arith.constant 0 : i32
    %c0_i32_1 = arith.constant 0 : i32
    return %c0_i32, %c0_i32_0 : i32, i32
  }
  func.func @transform_7(%arg0: i32) -> (i32, i32) {
    %c0_i32 = arith.constant 0 : i32
    %c0_i32_0 = arith.constant 0 : i32
    %c0_i32_1 = arith.constant 0 : i32
    return %c0_i32, %c0_i32_0 : i32, i32
  }
}

module attributes {stable_mosaic.version = 11 : i64} {
  func.func @_conv3x3_kernel(%arg0: i32, %arg1: memref<2x8x290xf32, #tpu.memory_space<vmem>>, %arg2: memref<8x72xf32, #tpu.memory_space<vmem>>, %arg3: memref<8x1xf32, #tpu.memory_space<vmem>>, %arg4: memref<9x1x256xf32, #tpu.memory_space<vmem>>, %arg5: memref<8x512xf32, #tpu.memory_space<vmem>>) attributes {dimension_semantics = [#tpu.dimension_semantics<arbitrary>], iteration_bounds = array<i64: 1>, scalar_prefetch = 0 : i64, scratch_operands = 0 : i64, tpu.core_type = #tpu.core_type<tc>, window_params = [{pipeline_mode = #tpu.pipeline_mode<synchronous>, transform_indices = @transform_0, window_bounds = array<i64: 2, 8, 290>}, {pipeline_mode = #tpu.pipeline_mode<synchronous>, transform_indices = @transform_1, window_bounds = array<i64: 8, 72>}, {pipeline_mode = #tpu.pipeline_mode<synchronous>, transform_indices = @transform_2, window_bounds = array<i64: 8, 1>}, {pipeline_mode = #tpu.pipeline_mode<synchronous>, transform_indices = @transform_3, window_bounds = array<i64: 9, 1, 256>}, {pipeline_mode = #tpu.pipeline_mode<synchronous>, transform_indices = @transform_4, window_bounds = array<i64: 8, 512>}]} {
    %c0 = arith.constant 0 : index
    %c0_0 = arith.constant 0 : index
    %c0_1 = arith.constant 0 : index
    %0 = vector.load %arg1[%c0, %c0_0, %c0_1] : memref<2x8x290xf32, #tpu.memory_space<vmem>>, vector<2x8x290xf32>
    %1 = vector.extract_strided_slice %0 {offsets = [0, 0, 0], sizes = [1, 8, 256], strides = [1, 1, 1]} : vector<2x8x290xf32> to vector<1x8x256xf32>
    %2 = vector.shape_cast %1 : vector<1x8x256xf32> to vector<8x256xf32>
    %c0_2 = arith.constant 0 : index
    %c0_3 = arith.constant 0 : index
    %c0_4 = arith.constant 0 : index
    %3 = vector.load %arg4[%c0_2, %c0_3, %c0_4] : memref<9x1x256xf32, #tpu.memory_space<vmem>>, vector<1x1x256xf32>
    %4 = vector.shape_cast %3 : vector<1x1x256xf32> to vector<1x256xf32>
    %5 = vector.broadcast %4 : vector<1x256xf32> to vector<8x256xf32>
    %6 = arith.mulf %2, %5 : vector<8x256xf32>
    %7 = vector.extract_strided_slice %0 {offsets = [1, 0, 0], sizes = [1, 8, 256], strides = [1, 1, 1]} : vector<2x8x290xf32> to vector<1x8x256xf32>
    %8 = vector.shape_cast %7 : vector<1x8x256xf32> to vector<8x256xf32>
    %c0_5 = arith.constant 0 : index
    %c0_6 = arith.constant 0 : index
    %c0_7 = arith.constant 0 : index
    %9 = vector.load %arg4[%c0_5, %c0_6, %c0_7] : memref<9x1x256xf32, #tpu.memory_space<vmem>>, vector<1x1x256xf32>
    %10 = vector.shape_cast %9 : vector<1x1x256xf32> to vector<1x256xf32>
    %11 = vector.broadcast %10 : vector<1x256xf32> to vector<8x256xf32>
    %12 = arith.mulf %8, %11 : vector<8x256xf32>
    %13 = tpu.concatenate %6, %12 in 1 : vector<8x256xf32>, vector<8x256xf32> -> vector<8x512xf32>
    %14 = vector.extract_strided_slice %0 {offsets = [0, 0, 1], sizes = [1, 8, 256], strides = [1, 1, 1]} : vector<2x8x290xf32> to vector<1x8x256xf32>
    %15 = vector.shape_cast %14 : vector<1x8x256xf32> to vector<8x256xf32>
    %c1 = arith.constant 1 : index
    %c0_8 = arith.constant 0 : index
    %c0_9 = arith.constant 0 : index
    %16 = vector.load %arg4[%c1, %c0_8, %c0_9] : memref<9x1x256xf32, #tpu.memory_space<vmem>>, vector<1x1x256xf32>
    %17 = vector.shape_cast %16 : vector<1x1x256xf32> to vector<1x256xf32>
    %18 = vector.broadcast %17 : vector<1x256xf32> to vector<8x256xf32>
    %19 = arith.mulf %15, %18 : vector<8x256xf32>
    %20 = vector.extract_strided_slice %0 {offsets = [1, 0, 1], sizes = [1, 8, 256], strides = [1, 1, 1]} : vector<2x8x290xf32> to vector<1x8x256xf32>
    %21 = vector.shape_cast %20 : vector<1x8x256xf32> to vector<8x256xf32>
    %c1_10 = arith.constant 1 : index
    %c0_11 = arith.constant 0 : index
    %c0_12 = arith.constant 0 : index
    %22 = vector.load %arg4[%c1_10, %c0_11, %c0_12] : memref<9x1x256xf32, #tpu.memory_space<vmem>>, vector<1x1x256xf32>
    %23 = vector.shape_cast %22 : vector<1x1x256xf32> to vector<1x256xf32>
    %24 = vector.broadcast %23 : vector<1x256xf32> to vector<8x256xf32>
    %25 = arith.mulf %21, %24 : vector<8x256xf32>
    %26 = tpu.concatenate %19, %25 in 1 : vector<8x256xf32>, vector<8x256xf32> -> vector<8x512xf32>
    %27 = vector.extract_strided_slice %0 {offsets = [0, 0, 2], sizes = [1, 8, 256], strides = [1, 1, 1]} : vector<2x8x290xf32> to vector<1x8x256xf32>
    %28 = vector.shape_cast %27 : vector<1x8x256xf32> to vector<8x256xf32>
    %c2 = arith.constant 2 : index
    %c0_13 = arith.constant 0 : index
    %c0_14 = arith.constant 0 : index
    %29 = vector.load %arg4[%c2, %c0_13, %c0_14] : memref<9x1x256xf32, #tpu.memory_space<vmem>>, vector<1x1x256xf32>
    %30 = vector.shape_cast %29 : vector<1x1x256xf32> to vector<1x256xf32>
    %31 = vector.broadcast %30 : vector<1x256xf32> to vector<8x256xf32>
    %32 = arith.mulf %28, %31 : vector<8x256xf32>
    %33 = vector.extract_strided_slice %0 {offsets = [1, 0, 2], sizes = [1, 8, 256], strides = [1, 1, 1]} : vector<2x8x290xf32> to vector<1x8x256xf32>
    %34 = vector.shape_cast %33 : vector<1x8x256xf32> to vector<8x256xf32>
    %c2_15 = arith.constant 2 : index
    %c0_16 = arith.constant 0 : index
    %c0_17 = arith.constant 0 : index
    %35 = vector.load %arg4[%c2_15, %c0_16, %c0_17] : memref<9x1x256xf32, #tpu.memory_space<vmem>>, vector<1x1x256xf32>
    %36 = vector.shape_cast %35 : vector<1x1x256xf32> to vector<1x256xf32>
    %37 = vector.broadcast %36 : vector<1x256xf32> to vector<8x256xf32>
    %38 = arith.mulf %34, %37 : vector<8x256xf32>
    %39 = tpu.concatenate %32, %38 in 1 : vector<8x256xf32>, vector<8x256xf32> -> vector<8x512xf32>
    %40 = vector.extract_strided_slice %0 {offsets = [0, 0, 16], sizes = [1, 8, 256], strides = [1, 1, 1]} : vector<2x8x290xf32> to vector<1x8x256xf32>
    %41 = vector.shape_cast %40 : vector<1x8x256xf32> to vector<8x256xf32>
    %c3 = arith.constant 3 : index
    %c0_18 = arith.constant 0 : index
    %c0_19 = arith.constant 0 : index
    %42 = vector.load %arg4[%c3, %c0_18, %c0_19] : memref<9x1x256xf32, #tpu.memory_space<vmem>>, vector<1x1x256xf32>
    %43 = vector.shape_cast %42 : vector<1x1x256xf32> to vector<1x256xf32>
    %44 = vector.broadcast %43 : vector<1x256xf32> to vector<8x256xf32>
    %45 = arith.mulf %41, %44 : vector<8x256xf32>
    %46 = vector.extract_strided_slice %0 {offsets = [1, 0, 16], sizes = [1, 8, 256], strides = [1, 1, 1]} : vector<2x8x290xf32> to vector<1x8x256xf32>
    %47 = vector.shape_cast %46 : vector<1x8x256xf32> to vector<8x256xf32>
    %c3_20 = arith.constant 3 : index
    %c0_21 = arith.constant 0 : index
    %c0_22 = arith.constant 0 : index
    %48 = vector.load %arg4[%c3_20, %c0_21, %c0_22] : memref<9x1x256xf32, #tpu.memory_space<vmem>>, vector<1x1x256xf32>
    %49 = vector.shape_cast %48 : vector<1x1x256xf32> to vector<1x256xf32>
    %50 = vector.broadcast %49 : vector<1x256xf32> to vector<8x256xf32>
    %51 = arith.mulf %47, %50 : vector<8x256xf32>
    %52 = tpu.concatenate %45, %51 in 1 : vector<8x256xf32>, vector<8x256xf32> -> vector<8x512xf32>
    %53 = vector.extract_strided_slice %0 {offsets = [0, 0, 17], sizes = [1, 8, 256], strides = [1, 1, 1]} : vector<2x8x290xf32> to vector<1x8x256xf32>
    %54 = vector.shape_cast %53 : vector<1x8x256xf32> to vector<8x256xf32>
    %c4 = arith.constant 4 : index
    %c0_23 = arith.constant 0 : index
    %c0_24 = arith.constant 0 : index
    %55 = vector.load %arg4[%c4, %c0_23, %c0_24] : memref<9x1x256xf32, #tpu.memory_space<vmem>>, vector<1x1x256xf32>
    %56 = vector.shape_cast %55 : vector<1x1x256xf32> to vector<1x256xf32>
    %57 = vector.broadcast %56 : vector<1x256xf32> to vector<8x256xf32>
    %58 = arith.mulf %54, %57 : vector<8x256xf32>
    %59 = vector.extract_strided_slice %0 {offsets = [1, 0, 17], sizes = [1, 8, 256], strides = [1, 1, 1]} : vector<2x8x290xf32> to vector<1x8x256xf32>
    %60 = vector.shape_cast %59 : vector<1x8x256xf32> to vector<8x256xf32>
    %c4_25 = arith.constant 4 : index
    %c0_26 = arith.constant 0 : index
    %c0_27 = arith.constant 0 : index
    %61 = vector.load %arg4[%c4_25, %c0_26, %c0_27] : memref<9x1x256xf32, #tpu.memory_space<vmem>>, vector<1x1x256xf32>
    %62 = vector.shape_cast %61 : vector<1x1x256xf32> to vector<1x256xf32>
    %63 = vector.broadcast %62 : vector<1x256xf32> to vector<8x256xf32>
    %64 = arith.mulf %60, %63 : vector<8x256xf32>
    %65 = tpu.concatenate %58, %64 in 1 : vector<8x256xf32>, vector<8x256xf32> -> vector<8x512xf32>
    %66 = vector.extract_strided_slice %0 {offsets = [0, 0, 18], sizes = [1, 8, 256], strides = [1, 1, 1]} : vector<2x8x290xf32> to vector<1x8x256xf32>
    %67 = vector.shape_cast %66 : vector<1x8x256xf32> to vector<8x256xf32>
    %c5 = arith.constant 5 : index
    %c0_28 = arith.constant 0 : index
    %c0_29 = arith.constant 0 : index
    %68 = vector.load %arg4[%c5, %c0_28, %c0_29] : memref<9x1x256xf32, #tpu.memory_space<vmem>>, vector<1x1x256xf32>
    %69 = vector.shape_cast %68 : vector<1x1x256xf32> to vector<1x256xf32>
    %70 = vector.broadcast %69 : vector<1x256xf32> to vector<8x256xf32>
    %71 = arith.mulf %67, %70 : vector<8x256xf32>
    %72 = vector.extract_strided_slice %0 {offsets = [1, 0, 18], sizes = [1, 8, 256], strides = [1, 1, 1]} : vector<2x8x290xf32> to vector<1x8x256xf32>
    %73 = vector.shape_cast %72 : vector<1x8x256xf32> to vector<8x256xf32>
    %c5_30 = arith.constant 5 : index
    %c0_31 = arith.constant 0 : index
    %c0_32 = arith.constant 0 : index
    %74 = vector.load %arg4[%c5_30, %c0_31, %c0_32] : memref<9x1x256xf32, #tpu.memory_space<vmem>>, vector<1x1x256xf32>
    %75 = vector.shape_cast %74 : vector<1x1x256xf32> to vector<1x256xf32>
    %76 = vector.broadcast %75 : vector<1x256xf32> to vector<8x256xf32>
    %77 = arith.mulf %73, %76 : vector<8x256xf32>
    %78 = tpu.concatenate %71, %77 in 1 : vector<8x256xf32>, vector<8x256xf32> -> vector<8x512xf32>
    %79 = vector.extract_strided_slice %0 {offsets = [0, 0, 32], sizes = [1, 8, 256], strides = [1, 1, 1]} : vector<2x8x290xf32> to vector<1x8x256xf32>
    %80 = vector.shape_cast %79 : vector<1x8x256xf32> to vector<8x256xf32>
    %c6 = arith.constant 6 : index
    %c0_33 = arith.constant 0 : index
    %c0_34 = arith.constant 0 : index
    %81 = vector.load %arg4[%c6, %c0_33, %c0_34] : memref<9x1x256xf32, #tpu.memory_space<vmem>>, vector<1x1x256xf32>
    %82 = vector.shape_cast %81 : vector<1x1x256xf32> to vector<1x256xf32>
    %83 = vector.broadcast %82 : vector<1x256xf32> to vector<8x256xf32>
    %84 = arith.mulf %80, %83 : vector<8x256xf32>
    %85 = vector.extract_strided_slice %0 {offsets = [1, 0, 32], sizes = [1, 8, 256], strides = [1, 1, 1]} : vector<2x8x290xf32> to vector<1x8x256xf32>
    %86 = vector.shape_cast %85 : vector<1x8x256xf32> to vector<8x256xf32>
    %c6_35 = arith.constant 6 : index
    %c0_36 = arith.constant 0 : index
    %c0_37 = arith.constant 0 : index
    %87 = vector.load %arg4[%c6_35, %c0_36, %c0_37] : memref<9x1x256xf32, #tpu.memory_space<vmem>>, vector<1x1x256xf32>
    %88 = vector.shape_cast %87 : vector<1x1x256xf32> to vector<1x256xf32>
    %89 = vector.broadcast %88 : vector<1x256xf32> to vector<8x256xf32>
    %90 = arith.mulf %86, %89 : vector<8x256xf32>
    %91 = tpu.concatenate %84, %90 in 1 : vector<8x256xf32>, vector<8x256xf32> -> vector<8x512xf32>
    %92 = vector.extract_strided_slice %0 {offsets = [0, 0, 33], sizes = [1, 8, 256], strides = [1, 1, 1]} : vector<2x8x290xf32> to vector<1x8x256xf32>
    %93 = vector.shape_cast %92 : vector<1x8x256xf32> to vector<8x256xf32>
    %c7 = arith.constant 7 : index
    %c0_38 = arith.constant 0 : index
    %c0_39 = arith.constant 0 : index
    %94 = vector.load %arg4[%c7, %c0_38, %c0_39] : memref<9x1x256xf32, #tpu.memory_space<vmem>>, vector<1x1x256xf32>
    %95 = vector.shape_cast %94 : vector<1x1x256xf32> to vector<1x256xf32>
    %96 = vector.broadcast %95 : vector<1x256xf32> to vector<8x256xf32>
    %97 = arith.mulf %93, %96 : vector<8x256xf32>
    %98 = vector.extract_strided_slice %0 {offsets = [1, 0, 33], sizes = [1, 8, 256], strides = [1, 1, 1]} : vector<2x8x290xf32> to vector<1x8x256xf32>
    %99 = vector.shape_cast %98 : vector<1x8x256xf32> to vector<8x256xf32>
    %c7_40 = arith.constant 7 : index
    %c0_41 = arith.constant 0 : index
    %c0_42 = arith.constant 0 : index
    %100 = vector.load %arg4[%c7_40, %c0_41, %c0_42] : memref<9x1x256xf32, #tpu.memory_space<vmem>>, vector<1x1x256xf32>
    %101 = vector.shape_cast %100 : vector<1x1x256xf32> to vector<1x256xf32>
    %102 = vector.broadcast %101 : vector<1x256xf32> to vector<8x256xf32>
    %103 = arith.mulf %99, %102 : vector<8x256xf32>
    %104 = tpu.concatenate %97, %103 in 1 : vector<8x256xf32>, vector<8x256xf32> -> vector<8x512xf32>
    %105 = vector.extract_strided_slice %0 {offsets = [0, 0, 34], sizes = [1, 8, 256], strides = [1, 1, 1]} : vector<2x8x290xf32> to vector<1x8x256xf32>
    %106 = vector.shape_cast %105 : vector<1x8x256xf32> to vector<8x256xf32>
    %c8 = arith.constant 8 : index
    %c0_43 = arith.constant 0 : index
    %c0_44 = arith.constant 0 : index
    %107 = vector.load %arg4[%c8, %c0_43, %c0_44] : memref<9x1x256xf32, #tpu.memory_space<vmem>>, vector<1x1x256xf32>
    %108 = vector.shape_cast %107 : vector<1x1x256xf32> to vector<1x256xf32>
    %109 = vector.broadcast %108 : vector<1x256xf32> to vector<8x256xf32>
    %110 = arith.mulf %106, %109 : vector<8x256xf32>
    %111 = vector.extract_strided_slice %0 {offsets = [1, 0, 34], sizes = [1, 8, 256], strides = [1, 1, 1]} : vector<2x8x290xf32> to vector<1x8x256xf32>
    %112 = vector.shape_cast %111 : vector<1x8x256xf32> to vector<8x256xf32>
    %c8_45 = arith.constant 8 : index
    %c0_46 = arith.constant 0 : index
    %c0_47 = arith.constant 0 : index
    %113 = vector.load %arg4[%c8_45, %c0_46, %c0_47] : memref<9x1x256xf32, #tpu.memory_space<vmem>>, vector<1x1x256xf32>
    %114 = vector.shape_cast %113 : vector<1x1x256xf32> to vector<1x256xf32>
    %115 = vector.broadcast %114 : vector<1x256xf32> to vector<8x256xf32>
    %116 = arith.mulf %112, %115 : vector<8x256xf32>
    %117 = tpu.concatenate %110, %116 in 1 : vector<8x256xf32>, vector<8x256xf32> -> vector<8x512xf32>
    %118 = tpu.concatenate %13, %26, %39, %52, %65, %78, %91, %104, %117 in 0 : vector<8x512xf32>, vector<8x512xf32>, vector<8x512xf32>, vector<8x512xf32>, vector<8x512xf32>, vector<8x512xf32>, vector<8x512xf32>, vector<8x512xf32>, vector<8x512xf32> -> vector<72x512xf32>
    %c0_48 = arith.constant 0 : index
    %c0_49 = arith.constant 0 : index
    %119 = vector.load %arg2[%c0_48, %c0_49] : memref<8x72xf32, #tpu.memory_space<vmem>>, vector<8x72xf32>
    %cst = arith.constant dense<0.000000e+00> : vector<8x512xf32>
    %120 = tpu.matmul %119, %118, %cst {dimension_numbers = #tpu.dot_dimension_numbers<[1], [0], [0], [1], [0, 0, 1, 1], [], []>} : vector<8x72xf32>, vector<72x512xf32>, vector<8x512xf32> -> vector<8x512xf32>
    %c0_50 = arith.constant 0 : index
    %c0_51 = arith.constant 0 : index
    %121 = vector.load %arg3[%c0_50, %c0_51] : memref<8x1xf32, #tpu.memory_space<vmem>>, vector<8x1xf32>
    %122 = vector.broadcast %121 : vector<8x1xf32> to vector<8x512xf32>
    %123 = arith.addf %120, %122 : vector<8x512xf32>
    %c0_52 = arith.constant 0 : index
    %c0_53 = arith.constant 0 : index
    %124 = vector.load %arg5[%c0_52, %c0_53] : memref<8x512xf32, #tpu.memory_space<vmem>>, vector<8x512xf32>
    tpu.vector_store %arg5[%c0_52, %c0_53], %123 {strides = array<i32>} : memref<8x512xf32, #tpu.memory_space<vmem>>, vector<8x512xf32>,
    return
  }
  func.func @transform_0(%arg0: i32) -> (i32, i32, i32) {
    %c0_i32 = arith.constant 0 : i32
    %c0_i32_0 = arith.constant 0 : i32
    %c0_i32_1 = arith.constant 0 : i32
    %c0_i32_2 = arith.constant 0 : i32
    return %c0_i32, %c0_i32_0, %c0_i32_1 : i32, i32, i32
  }
  func.func @transform_1(%arg0: i32) -> (i32, i32) {
    %c0_i32 = arith.constant 0 : i32
    %c0_i32_0 = arith.constant 0 : i32
    %c0_i32_1 = arith.constant 0 : i32
    return %c0_i32, %c0_i32_0 : i32, i32
  }
  func.func @transform_2(%arg0: i32) -> (i32, i32) {
    %c0_i32 = arith.constant 0 : i32
    %c0_i32_0 = arith.constant 0 : i32
    %c0_i32_1 = arith.constant 0 : i32
    return %c0_i32, %c0_i32_0 : i32, i32
  }
  func.func @transform_3(%arg0: i32) -> (i32, i32, i32) {
    %c0_i32 = arith.constant 0 : i32
    %c0_i32_0 = arith.constant 0 : i32
    %c0_i32_1 = arith.constant 0 : i32
    %c0_i32_2 = arith.constant 0 : i32
    return %c0_i32, %c0_i32_0, %c0_i32_1 : i32, i32, i32
  }
  func.func @transform_4(%arg0: i32) -> (i32, i32) {
    %c0_i32 = arith.constant 0 : i32
    %c0_i32_0 = arith.constant 0 : i32
    %c0_i32_1 = arith.constant 0 : i32
    return %c0_i32, %c0_i32_0 : i32, i32
  }
}

</mosaic_0001>

<llo_original>
// kernel: tile.13
$region0: #{tile.13}
  #allocation0 [shape = 's32[1]{0}', space=sflag, size = 0x4, scoped, tag = 'scoped memory for tile.13']
  %s0 = inlined_call_operand.vmem [shape: f32[2], index: 0, kind: input, shape index: {}]
  %s1 = inlined_call_operand.vmem [shape: f32[2,2], index: 1, kind: output, shape index: {}]
  // Predicated region
  $region2: #{tile.13} parent=0 // pred_check
    _
  $region3: #{tile.13} parent=0 // pred_check_branch
    %3 = sbr.rel (0) target = $region5
  $region4: #{tile.13} parent=0 // pred_region
    _
  $region5: #{tile.13} parent=0 // pred_fallthru
    _
  %v4 = vld [vmem:[%s0] ss:$0 sm:$0xff]
  %5 = vst [vmem:[%s1] sm:$0x3] %v4

// kernel: _lambda_.4
$region0: #{_lambda_.4}
  #allocation0 [shape = 'u32[]', space=smem, size = 0x4, offset = 0x4, fixed_abs, tag = 'smem constant byte address 0x4 - core index']
  #allocation1 [shape = 'u32[144,128]{1,0:T(1,128)}', space=vmem, size = 0x12000, scoped, tag = 'internal scratch']
  %s0 = inlined_call_operand.vmem [shape: f32[8,256], index: 0, kind: input, shape index: {}]
  %s1 = inlined_call_operand.vmem [shape: f32[256,256], index: 1, kind: input, shape index: {}]
  %s2 = inlined_call_operand.vmem [shape: f32[256,256], index: 2, kind: input, shape index: {}]
  %s3 = inlined_call_operand.vmem [shape: f32[256,256], index: 3, kind: input, shape index: {}]
  %s4 = inlined_call_operand.vmem [shape: f32[256,256], index: 4, kind: input, shape index: {}]
  %s5 = inlined_call_operand.vmem [shape: f32[16,16], index: 5, kind: input, shape index: {}]
  %s6 = inlined_call_operand.vmem [shape: f32[16,1], index: 6, kind: input, shape index: {}]
  %s7 = inlined_call_operand.vmem [shape: f32[8,256], index: 7, kind: output, shape index: {}]
  %s8 = sld [smem:[#allocation0]]
  $region38: #{_lambda_.4} parent=0
    _
  %s10 = ssub.s32 1, %s8
  %s11 = scalar_select 0, %s10, %s8
  // Predicated region
  $region2: #{_lambda_.4} parent=0 // pred_check
    _
  $region3: #{_lambda_.4} parent=0 // pred_check_branch
    %13 = sbr.rel (0) target = $region5
  $region4: #{_lambda_.4} parent=0 // pred_region
    _
  $region5: #{_lambda_.4} parent=0 // pred_fallthru
    _
  // Predicated region
  $region6: #{_lambda_.4} parent=0 // pred_check
    _
  $region7: #{_lambda_.4} parent=0 // pred_check_branch
    %15 = sbr.rel (0) target = $region9
  $region8: #{_lambda_.4} parent=0 // pred_region
    _
  $region9: #{_lambda_.4} parent=0 // pred_fallthru
    _
  // Predicated region
  $region10: #{_lambda_.4} parent=0 // pred_check
    _
  $region11: #{_lambda_.4} parent=0 // pred_check_branch
    %17 = sbr.rel (0) target = $region13
  $region12: #{_lambda_.4} parent=0 // pred_region
    _
  $region13: #{_lambda_.4} parent=0 // pred_fallthru
    _
  // Predicated region
  $region14: #{_lambda_.4} parent=0 // pred_check
    _
  $region15: #{_lambda_.4} parent=0 // pred_check_branch
    %19 = sbr.rel (0) target = $region17
  $region16: #{_lambda_.4} parent=0 // pred_region
    _
  $region17: #{_lambda_.4} parent=0 // pred_fallthru
    _
  // Predicated region
  $region18: #{_lambda_.4} parent=0 // pred_check
    _
  $region19: #{_lambda_.4} parent=0 // pred_check_branch
    %21 = sbr.rel (0) target = $region21
  $region20: #{_lambda_.4} parent=0 // pred_region
    _
  $region21: #{_lambda_.4} parent=0 // pred_fallthru
    _
  // Predicated region
  $region22: #{_lambda_.4} parent=0 // pred_check
    _
  $region23: #{_lambda_.4} parent=0 // pred_check_branch
    %23 = sbr.rel (0) target = $region25
  $region24: #{_lambda_.4} parent=0 // pred_region
    _
  $region25: #{_lambda_.4} parent=0 // pred_fallthru
    _
  // Predicated region
  $region26: #{_lambda_.4} parent=0 // pred_check
    _
  $region27: #{_lambda_.4} parent=0 // pred_check_branch
    %25 = sbr.rel (0) target = $region29
  $region28: #{_lambda_.4} parent=0 // pred_region
    _
  $region29: #{_lambda_.4} parent=0 // pred_fallthru
    _
  %v26 = vld [vmem:[%s0] sm:$0xff]
  %v27 = vld [vmem:[%s0 + $0x8] sm:$0xff]
  %v28 = vld [vmem:[%s1] sm:$0xff]
  %v29 = vld [vmem:[%s1 + $0x8] sm:$0xff]
  %v30 = vld [vmem:[%s1 + $0x10] sm:$0xff]
  %v31 = vld [vmem:[%s1 + $0x18] sm:$0xff]
  %v32 = vld [vmem:[%s1 + $0x20] sm:$0xff]
  %v33 = vld [vmem:[%s1 + $0x28] sm:$0xff]
  %v34 = vld [vmem:[%s1 + $0x30] sm:$0xff]
  %v35 = vld [vmem:[%s1 + $0x38] sm:$0xff]
  %v36 = vld [vmem:[%s1 + $0x40] sm:$0xff]
  %v37 = vld [vmem:[%s1 + $0x48] sm:$0xff]
  %v38 = vld [vmem:[%s1 + $0x50] sm:$0xff]
  %v39 = vld [vmem:[%s1 + $0x58] sm:$0xff]
  %v40 = vld [vmem:[%s1 + $0x60] sm:$0xff]
  %v41 = vld [vmem:[%s1 + $0x68] sm:$0xff]
  %v42 = vld [vmem:[%s1 + $0x70] sm:$0xff]
  %v43 = vld [vmem:[%s1 + $0x78] sm:$0xff]
  %v44 = vld [vmem:[%s1 + $0x80] sm:$0xff]
  %v45 = vld [vmem:[%s1 + $0x88] sm:$0xff]
  %v46 = vld [vmem:[%s1 + $0x90] sm:$0xff]
  %v47 = vld [vmem:[%s1 + $0x98] sm:$0xff]
  %v48 = vld [vmem:[%s1 + $0xa0] sm:$0xff]
  %v49 = vld [vmem:[%s1 + $0xa8] sm:$0xff]
  %v50 = vld [vmem:[%s1 + $0xb0] sm:$0xff]
  %v51 = vld [vmem:[%s1 + $0xb8] sm:$0xff]
  %v52 = vld [vmem:[%s1 + $0xc0] sm:$0xff]
  %v53 = vld [vmem:[%s1 + $0xc8] sm:$0xff]
  %v54 = vld [vmem:[%s1 + $0xd0] sm:$0xff]
  %v55 = vld [vmem:[%s1 + $0xd8] sm:$0xff]
  %v56 = vld [vmem:[%s1 + $0xe0] sm:$0xff]
  %v57 = vld [vmem:[%s1 + $0xe8] sm:$0xff]
  %v58 = vld [vmem:[%s1 + $0xf0] sm:$0xff]
  %v59 = vld [vmem:[%s1 + $0xf8] sm:$0xff]
  %v60 = vld [vmem:[%s1 + $0x100] sm:$0xff]
  %v61 = vld [vmem:[%s1 + $0x108] sm:$0xff]
  %v62 = vld [vmem:[%s1 + $0x110] sm:$0xff]
  %v63 = vld [vmem:[%s1 + $0x118] sm:$0xff]
  %v64 = vld [vmem:[%s1 + $0x120] sm:$0xff]
  %v65 = vld [vmem:[%s1 + $0x128] sm:$0xff]
  %v66 = vld [vmem:[%s1 + $0x130] sm:$0xff]
  %v67 = vld [vmem:[%s1 + $0x138] sm:$0xff]
  %v68 = vld [vmem:[%s1 + $0x140] sm:$0xff]
  %v69 = vld [vmem:[%s1 + $0x148] sm:$0xff]
  %v70 = vld [vmem:[%s1 + $0x150] sm:$0xff]
  %v71 = vld [vmem:[%s1 + $0x158] sm:$0xff]
  %v72 = vld [vmem:[%s1 + $0x160] sm:$0xff]
  %v73 = vld [vmem:[%s1 + $0x168] sm:$0xff]
  %v74 = vld [vmem:[%s1 + $0x170] sm:$0xff]
  %v75 = vld [vmem:[%s1 + $0x178] sm:$0xff]
  %v76 = vld [vmem:[%s1 + $0x180] sm:$0xff]
  %v77 = vld [vmem:[%s1 + $0x188] sm:$0xff]
  %v78 = vld [vmem:[%s1 + $0x190] sm:$0xff]
  %v79 = vld [vmem:[%s1 + $0x198] sm:$0xff]
  %v80 = vld [vmem:[%s1 + $0x1a0] sm:$0xff]
  %v81 = vld [vmem:[%s1 + $0x1a8] sm:$0xff]
  %v82 = vld [vmem:[%s1 + $0x1b0] sm:$0xff]
  %v83 = vld [vmem:[%s1 + $0x1b8] sm:$0xff]
  %v84 = vld [vmem:[%s1 + $0x1c0] sm:$0xff]
  %v85 = vld [vmem:[%s1 + $0x1c8] sm:$0xff]
  %v86 = vld [vmem:[%s1 + $0x1d0] sm:$0xff]
  %v87 = vld [vmem:[%s1 + $0x1d8] sm:$0xff]
  %v88 = vld [vmem:[%s1 + $0x1e0] sm:$0xff]
  %v89 = vld [vmem:[%s1 + $0x1e8] sm:$0xff]
  %v90 = vld [vmem:[%s1 + $0x1f0] sm:$0xff]
  %v91 = vld [vmem:[%s1 + $0x1f8] sm:$0xff]
  %92 = vmatprep.subr.mxu0 %v59
  %93 = vmatpush1.msra.mxu0 %v58
  %94 = vmatprep.subr.mxu0 %v57
  %95 = vmatpush1.msra.mxu0 %v56
  %96 = vmatprep.subr.mxu0 %v55
  %97 = vmatpush1.msra.mxu0 %v54
  %98 = vmatprep.subr.mxu0 %v53
  %99 = vmatpush1.msra.mxu0 %v52
  %100 = vmatprep.subr.mxu0 %v51
  %101 = vmatpush1.msra.mxu0 %v50
  %102 = vmatprep.subr.mxu0 %v49
  %103 = vmatpush1.msra.mxu0 %v48
  %104 = vmatprep.subr.mxu0 %v47
  %105 = vmatpush1.msra.mxu0 %v46
  %106 = vmatprep.subr.mxu0 %v45
  %107 = vmatpush1.msra.mxu0 %v44
  %108 = vmatprep.subr.mxu0 %v43
  %109 = vmatpush1.msra.mxu0 %v42
  %110 = vmatprep.subr.mxu0 %v41
  %111 = vmatpush1.msra.mxu0 %v40
  %112 = vmatprep.subr.mxu0 %v39
  %113 = vmatpush1.msra.mxu0 %v38
  %114 = vmatprep.subr.mxu0 %v37
  %115 = vmatpush1.msra.mxu0 %v36
  %116 = vmatprep.subr.mxu0 %v35
  %117 = vmatpush1.msra.mxu0 %v34
  %118 = vmatprep.subr.mxu0 %v33
  %119 = vmatpush1.msra.mxu0 %v32
  %120 = vmatprep.subr.mxu0 %v31
  %121 = vmatpush1.msra.mxu0 %v30
  %122 = vmatprep.subr.mxu0 %v29
  %123 = vmatpush1.msra.mxu0 %v28
  %124 = vmatprep.subr.mxu0 %v91
  %125 = vmatpush2.msra.mxu0 %v90
  %126 = vmatprep.subr.mxu0 %v89
  %127 = vmatpush2.msra.mxu0 %v88
  %128 = vmatprep.subr.mxu0 %v87
  %129 = vmatpush2.msra.mxu0 %v86
  %130 = vmatprep.subr.mxu0 %v85
  %131 = vmatpush2.msra.mxu0 %v84
  %132 = vmatprep.subr.mxu0 %v83
  %133 = vmatpush2.msra.mxu0 %v82
  %134 = vmatprep.subr.mxu0 %v81
  %135 = vmatpush2.msra.mxu0 %v80
  %136 = vmatprep.subr.mxu0 %v79
  %137 = vmatpush2.msra.mxu0 %v78
  %138 = vmatprep.subr.mxu0 %v77
  %139 = vmatpush2.msra.mxu0 %v76
  %140 = vmatprep.subr.mxu0 %v75
  %141 = vmatpush2.msra.mxu0 %v74
  %142 = vmatprep.subr.mxu0 %v73
  %143 = vmatpush2.msra.mxu0 %v72
  %144 = vmatprep.subr.mxu0 %v71
  %145 = vmatpush2.msra.mxu0 %v70
  %146 = vmatprep.subr.mxu0 %v69
  %147 = vmatpush2.msra.mxu0 %v68
  %148 = vmatprep.subr.mxu0 %v67
  %149 = vmatpush2.msra.mxu0 %v66
  %150 = vmatprep.subr.mxu0 %v65
  %151 = vmatpush2.msra.mxu0 %v64
  %152 = vmatprep.subr.mxu0 %v63
  %153 = vmatpush2.msra.mxu0 %v62
  %154 = vmatprep.subr.mxu0 %v61
  %155 = vmatpush2.msra.mxu0 %v60
  %156 = vmatprep.mubr.f32.mxu0 %v27
  %157 = vmatmul.mubr.f32.gmra.mxu0 %v26
  %v158 = vpop.f32.mrf.mxu0
  %v159 = vadd.f32 0.0, %v158
  %v160 = vpop.f32.mrf.mxu0
  %v161 = vadd.f32 0.0, %v160
  %162 = vdwg.mxu0
  %v163 = vld [vmem:[%s2] sm:$0xff]
  %v164 = vld [vmem:[%s2 + $0x8] sm:$0xff]
  %v165 = vld [vmem:[%s2 + $0x10] sm:$0xff]
  %v166 = vld [vmem:[%s2 + $0x18] sm:$0xff]
  %v167 = vld [vmem:[%s2 + $0x20] sm:$0xff]
  %v168 = vld [vmem:[%s2 + $0x28] sm:$0xff]
  %v169 = vld [vmem:[%s2 + $0x30] sm:$0xff]
  %v170 = vld [vmem:[%s2 + $0x38] sm:$0xff]
  %v171 = vld [vmem:[%s2 + $0x40] sm:$0xff]
  %v172 = vld [vmem:[%s2 + $0x48] sm:$0xff]
  %v173 = vld [vmem:[%s2 + $0x50] sm:$0xff]
  %v174 = vld [vmem:[%s2 + $0x58] sm:$0xff]
  %v175 = vld [vmem:[%s2 + $0x60] sm:$0xff]
  %v176 = vld [vmem:[%s2 + $0x68] sm:$0xff]
  %v177 = vld [vmem:[%s2 + $0x70] sm:$0xff]
  %v178 = vld [vmem:[%s2 + $0x78] sm:$0xff]
  %v179 = vld [vmem:[%s2 + $0x80] sm:$0xff]
  %v180 = vld [vmem:[%s2 + $0x88] sm:$0xff]
  %v181 = vld [vmem:[%s2 + $0x90] sm:$0xff]
  %v182 = vld [vmem:[%s2 + $0x98] sm:$0xff]
  %v183 = vld [vmem:[%s2 + $0xa0] sm:$0xff]
  %v184 = vld [vmem:[%s2 + $0xa8] sm:$0xff]
  %v185 = vld [vmem:[%s2 + $0xb0] sm:$0xff]
  %v186 = vld [vmem:[%s2 + $0xb8] sm:$0xff]
  %v187 = vld [vmem:[%s2 + $0xc0] sm:$0xff]
  %v188 = vld [vmem:[%s2 + $0xc8] sm:$0xff]
  %v189 = vld [vmem:[%s2 + $0xd0] sm:$0xff]
  %v190 = vld [vmem:[%s2 + $0xd8] sm:$0xff]
  %v191 = vld [vmem:[%s2 + $0xe0] sm:$0xff]
  %v192 = vld [vmem:[%s2 + $0xe8] sm:$0xff]
  %v193 = vld [vmem:[%s2 + $0xf0] sm:$0xff]
  %v194 = vld [vmem:[%s2 + $0xf8] sm:$0xff]
  %v195 = vld [vmem:[%s2 + $0x100] sm:$0xff]
  %v196 = vld [vmem:[%s2 + $0x108] sm:$0xff]
  %v197 = vld [vmem:[%s2 + $0x110] sm:$0xff]
  %v198 = vld [vmem:[%s2 + $0x118] sm:$0xff]
  %v199 = vld [vmem:[%s2 + $0x120] sm:$0xff]
  %v200 = vld [vmem:[%s2 + $0x128] sm:$0xff]
  %v201 = vld [vmem:[%s2 + $0x130] sm:$0xff]
  %v202 = vld [vmem:[%s2 + $0x138] sm:$0xff]
  %v203 = vld [vmem:[%s2 + $0x140] sm:$0xff]
  %v204 = vld [vmem:[%s2 + $0x148] sm:$0xff]
  %v205 = vld [vmem:[%s2 + $0x150] sm:$0xff]
  %v206 = vld [vmem:[%s2 + $0x158] sm:$0xff]
  %v207 = vld [vmem:[%s2 + $0x160] sm:$0xff]
  %v208 = vld [vmem:[%s2 + $0x168] sm:$0xff]
  %v209 = vld [vmem:[%s2 + $0x170] sm:$0xff]
  %v210 = vld [vmem:[%s2 + $0x178] sm:$0xff]
  %v211 = vld [vmem:[%s2 + $0x180] sm:$0xff]
  %v212 = vld [vmem:[%s2 + $0x188] sm:$0xff]
  %v213 = vld [vmem:[%s2 + $0x190] sm:$0xff]
  %v214 = vld [vmem:[%s2 + $0x198] sm:$0xff]
  %v215 = vld [vmem:[%s2 + $0x1a0] sm:$0xff]
  %v216 = vld [vmem:[%s2 + $0x1a8] sm:$0xff]
  %v217 = vld [vmem:[%s2 + $0x1b0] sm:$0xff]
  %v218 = vld [vmem:[%s2 + $0x1b8] sm:$0xff]
  %v219 = vld [vmem:[%s2 + $0x1c0] sm:$0xff]
  %v220 = vld [vmem:[%s2 + $0x1c8] sm:$0xff]
  %v221 = vld [vmem:[%s2 + $0x1d0] sm:$0xff]
  %v222 = vld [vmem:[%s2 + $0x1d8] sm:$0xff]
  %v223 = vld [vmem:[%s2 + $0x1e0] sm:$0xff]
  %v224 = vld [vmem:[%s2 + $0x1e8] sm:$0xff]
  %v225 = vld [vmem:[%s2 + $0x1f0] sm:$0xff]
  %v226 = vld [vmem:[%s2 + $0x1f8] sm:$0xff]
  %227 = vmatprep.subr.mxu0 %v194
  %228 = vmatpush1.msra.mxu0 %v193
  %229 = vmatprep.subr.mxu0 %v192
  %230 = vmatpush1.msra.mxu0 %v191
  %231 = vmatprep.subr.mxu0 %v190
  %232 = vmatpush1.msra.mxu0 %v189
  %233 = vmatprep.subr.mxu0 %v188
  %234 = vmatpush1.msra.mxu0 %v187
  %235 = vmatprep.subr.mxu0 %v186
  %236 = vmatpush1.msra.mxu0 %v185
  %237 = vmatprep.subr.mxu0 %v184
  %238 = vmatpush1.msra.mxu0 %v183
  %239 = vmatprep.subr.mxu0 %v182
  %240 = vmatpush1.msra.mxu0 %v181
  %241 = vmatprep.subr.mxu0 %v180
  %242 = vmatpush1.msra.mxu0 %v179
  %243 = vmatprep.subr.mxu0 %v178
  %244 = vmatpush1.msra.mxu0 %v177
  %245 = vmatprep.subr.mxu0 %v176
  %246 = vmatpush1.msra.mxu0 %v175
  %247 = vmatprep.subr.mxu0 %v174
  %248 = vmatpush1.msra.mxu0 %v173
  %249 = vmatprep.subr.mxu0 %v172
  %250 = vmatpush1.msra.mxu0 %v171
  %251 = vmatprep.subr.mxu0 %v170
  %252 = vmatpush1.msra.mxu0 %v169
  %253 = vmatprep.subr.mxu0 %v168
  %254 = vmatpush1.msra.mxu0 %v167
  %255 = vmatprep.subr.mxu0 %v166
  %256 = vmatpush1.msra.mxu0 %v165
  %257 = vmatprep.subr.mxu0 %v164
  %258 = vmatpush1.msra.mxu0 %v163
  %259 = vmatprep.subr.mxu0 %v226
  %260 = vmatpush2.msra.mxu0 %v225
  %261 = vmatprep.subr.mxu0 %v224
  %262 = vmatpush2.msra.mxu0 %v223
  %263 = vmatprep.subr.mxu0 %v222
  %264 = vmatpush2.msra.mxu0 %v221
  %265 = vmatprep.subr.mxu0 %v220
  %266 = vmatpush2.msra.mxu0 %v219
  %267 = vmatprep.subr.mxu0 %v218
  %268 = vmatpush2.msra.mxu0 %v217
  %269 = vmatprep.subr.mxu0 %v216
  %270 = vmatpush2.msra.mxu0 %v215
  %271 = vmatprep.subr.mxu0 %v214
  %272 = vmatpush2.msra.mxu0 %v213
  %273 = vmatprep.subr.mxu0 %v212
  %274 = vmatpush2.msra.mxu0 %v211
  %275 = vmatprep.subr.mxu0 %v210
  %276 = vmatpush2.msra.mxu0 %v209
  %277 = vmatprep.subr.mxu0 %v208
  %278 = vmatpush2.msra.mxu0 %v207
  %279 = vmatprep.subr.mxu0 %v206
  %280 = vmatpush2.msra.mxu0 %v205
  %281 = vmatprep.subr.mxu0 %v204
  %282 = vmatpush2.msra.mxu0 %v203
  %283 = vmatprep.subr.mxu0 %v202
  %284 = vmatpush2.msra.mxu0 %v201
  %285 = vmatprep.subr.mxu0 %v200
  %286 = vmatpush2.msra.mxu0 %v199
  %287 = vmatprep.subr.mxu0 %v198
  %288 = vmatpush2.msra.mxu0 %v197
  %289 = vmatprep.subr.mxu0 %v196
  %290 = vmatpush2.msra.mxu0 %v195
  %291 = vmatprep.mubr.f32.mxu0 %v27
  %292 = vmatmul.mubr.f32.gmra.mxu0 %v26
  %v293 = vpop.f32.mrf.mxu0
  %v294 = vadd.f32 0.0, %v293
  %v295 = vpop.f32.mrf.mxu0
  %v296 = vadd.f32 0.0, %v295
  %297 = vdwg.mxu0
  %v298 = vld [vmem:[%s5] sm:$0xff]
  %v299 = vld [vmem:[%s5 + $0x8] sm:$0xff]
  %v300 = vld [vmem:[%s6] sm:$0xff]
  %v301 = vld [vmem:[%s6 + $0x8] sm:$0xff]
  %303 = vset.pattern.permute.xlu0 0
  %304 = vperm.xlu0 %303, %v300
  %v305 = vpop.permute.xlu0 %304
  %308 = vset.pattern.permute.xlu0 0
  %309 = vperm.xlu0 %308, %v301
  %v310 = vpop.permute.xlu0 %309
  %vm312 = vcmask 130048
  %v314 = vsel %vm312, %v298, 0
  %v317 = vsel %vm312, %v299, 0
  %319 = vmatprep.subr.mxu0 0.0
  %320 = vmatpush1.msra.mxu0 0.0
  %321 = vmatprep.subr.mxu0 0.0
  %322 = vmatpush1.msra.mxu0 0.0
  %323 = vmatprep.subr.mxu0 0.0
  %324 = vmatpush1.msra.mxu0 0.0
  %325 = vmatprep.subr.mxu0 0.0
  %326 = vmatpush1.msra.mxu0 0.0
  %327 = vmatprep.subr.mxu0 0.0
  %328 = vmatpush1.msra.mxu0 0.0
  %329 = vmatprep.subr.mxu0 0.0
  %330 = vmatpush1.msra.mxu0 0.0
  %331 = vmatprep.subr.mxu0 0.0
  %332 = vmatpush1.msra.mxu0 0.0
  %333 = vmatprep.subr.mxu0 0.0
  %334 = vmatpush1.msra.mxu0 0.0
  %335 = vmatprep.subr.mxu0 0.0
  %336 = vmatpush1.msra.mxu0 0.0
  %337 = vmatprep.subr.mxu0 0.0
  %338 = vmatpush1.msra.mxu0 0.0
  %339 = vmatprep.subr.mxu0 0.0
  %340 = vmatpush1.msra.mxu0 0.0
  %341 = vmatprep.subr.mxu0 0.0
  %342 = vmatpush1.msra.mxu0 0.0
  %343 = vmatprep.subr.mxu0 0.0
  %344 = vmatpush1.msra.mxu0 0.0
  %345 = vmatprep.subr.mxu0 0.0
  %346 = vmatpush1.msra.mxu0 0.0
  %347 = vmatprep.subr.mxu0 %v296
  %348 = vmatpush1.msra.mxu0 %v294
  %349 = vmatprep.subr.mxu0 %v161
  %350 = vmatpush1.msra.mxu0 %v159
  %351 = vmatprep.subr.mxu0 0.0
  %352 = vmatpush2.msra.mxu0 0.0
  %353 = vmatprep.subr.mxu0 0.0
  %354 = vmatpush2.msra.mxu0 0.0
  %355 = vmatprep.subr.mxu0 0.0
  %356 = vmatpush2.msra.mxu0 0.0
  %357 = vmatprep.subr.mxu0 0.0
  %358 = vmatpush2.msra.mxu0 0.0
  %359 = vmatprep.subr.mxu0 0.0
  %360 = vmatpush2.msra.mxu0 0.0
  %361 = vmatprep.subr.mxu0 0.0
  %362 = vmatpush2.msra.mxu0 0.0
  %363 = vmatprep.subr.mxu0 0.0
  %364 = vmatpush2.msra.mxu0 0.0
  %365 = vmatprep.subr.mxu0 0.0
  %366 = vmatpush2.msra.mxu0 0.0
  %367 = vmatprep.subr.mxu0 0.0
  %368 = vmatpush2.msra.mxu0 0.0
  %369 = vmatprep.subr.mxu0 0.0
  %370 = vmatpush2.msra.mxu0 0.0
  %371 = vmatprep.subr.mxu0 0.0
  %372 = vmatpush2.msra.mxu0 0.0
  %373 = vmatprep.subr.mxu0 0.0
  %374 = vmatpush2.msra.mxu0 0.0
  %375 = vmatprep.subr.mxu0 0.0
  %376 = vmatpush2.msra.mxu0 0.0
  %377 = vmatprep.subr.mxu0 0.0
  %378 = vmatpush2.msra.mxu0 0.0
  %379 = vmatprep.subr.mxu0 0.0
  %380 = vmatpush2.msra.mxu0 0.0
  %381 = vmatprep.subr.mxu0 0.0
  %382 = vmatpush2.msra.mxu0 0.0
  %383 = vmatprep.mubr.f32.mxu0 0.0
  %384 = vmatmul.mubr.f32.gmra.mxu0 %v314
  %v385 = vpop.f32.mrf.mxu0
  %v386 = vadd.f32 %v305, %v385
  %v387 = vpop.f32.mrf.mxu0
  %v388 = vadd.f32 %v305, %v387
  %389 = vmatprep.mubr.f32.mxu0 0.0
  %390 = vmatmul.mubr.f32.gmra.mxu0 %v317
  %v391 = vpop.f32.mrf.mxu0
  %v392 = vadd.f32 %v310, %v391
  %v393 = vpop.f32.mrf.mxu0
  %v394 = vadd.f32 %v310, %v393
  %395 = vdwg.mxu0
  %v396 = vld [vmem:[%s3] sm:$0xff]
  %v397 = vld [vmem:[%s3 + $0x8] sm:$0xff]
  %v398 = vld [vmem:[%s3 + $0x10] sm:$0xff]
  %v399 = vld [vmem:[%s3 + $0x18] sm:$0xff]
  %v400 = vld [vmem:[%s3 + $0x20] sm:$0xff]
  %v401 = vld [vmem:[%s3 + $0x28] sm:$0xff]
  %v402 = vld [vmem:[%s3 + $0x30] sm:$0xff]
  %v403 = vld [vmem:[%s3 + $0x38] sm:$0xff]
  %v404 = vld [vmem:[%s3 + $0x40] sm:$0xff]
  %v405 = vld [vmem:[%s3 + $0x48] sm:$0xff]
  %v406 = vld [vmem:[%s3 + $0x50] sm:$0xff]
  %v407 = vld [vmem:[%s3 + $0x58] sm:$0xff]
  %v408 = vld [vmem:[%s3 + $0x60] sm:$0xff]
  %v409 = vld [vmem:[%s3 + $0x68] sm:$0xff]
  %v410 = vld [vmem:[%s3 + $0x70] sm:$0xff]
  %v411 = vld [vmem:[%s3 + $0x78] sm:$0xff]
  %v412 = vld [vmem:[%s3 + $0x80] sm:$0xff]
  %v413 = vld [vmem:[%s3 + $0x88] sm:$0xff]
  %v414 = vld [vmem:[%s3 + $0x90] sm:$0xff]
  %v415 = vld [vmem:[%s3 + $0x98] sm:$0xff]
  %v416 = vld [vmem:[%s3 + $0xa0] sm:$0xff]
  %v417 = vld [vmem:[%s3 + $0xa8] sm:$0xff]
  %v418 = vld [vmem:[%s3 + $0xb0] sm:$0xff]
  %v419 = vld [vmem:[%s3 + $0xb8] sm:$0xff]
  %v420 = vld [vmem:[%s3 + $0xc0] sm:$0xff]
  %v421 = vld [vmem:[%s3 + $0xc8] sm:$0xff]
  %v422 = vld [vmem:[%s3 + $0xd0] sm:$0xff]
  %v423 = vld [vmem:[%s3 + $0xd8] sm:$0xff]
  %v424 = vld [vmem:[%s3 + $0xe0] sm:$0xff]
  %v425 = vld [vmem:[%s3 + $0xe8] sm:$0xff]
  %v426 = vld [vmem:[%s3 + $0xf0] sm:$0xff]
  %v427 = vld [vmem:[%s3 + $0xf8] sm:$0xff]
  %v428 = vld [vmem:[%s3 + $0x100] sm:$0xff]
  %v429 = vld [vmem:[%s3 + $0x108] sm:$0xff]
  %v430 = vld [vmem:[%s3 + $0x110] sm:$0xff]
  %v431 = vld [vmem:[%s3 + $0x118] sm:$0xff]
  %v432 = vld [vmem:[%s3 + $0x120] sm:$0xff]
  %v433 = vld [vmem:[%s3 + $0x128] sm:$0xff]
  %v434 = vld [vmem:[%s3 + $0x130] sm:$0xff]
  %v435 = vld [vmem:[%s3 + $0x138] sm:$0xff]
  %v436 = vld [vmem:[%s3 + $0x140] sm:$0xff]
  %v437 = vld [vmem:[%s3 + $0x148] sm:$0xff]
  %v438 = vld [vmem:[%s3 + $0x150] sm:$0xff]
  %v439 = vld [vmem:[%s3 + $0x158] sm:$0xff]
  %v440 = vld [vmem:[%s3 + $0x160] sm:$0xff]
  %v441 = vld [vmem:[%s3 + $0x168] sm:$0xff]
  %v442 = vld [vmem:[%s3 + $0x170] sm:$0xff]
  %v443 = vld [vmem:[%s3 + $0x178] sm:$0xff]
  %v444 = vld [vmem:[%s3 + $0x180] sm:$0xff]
  %v445 = vld [vmem:[%s3 + $0x188] sm:$0xff]
  %v446 = vld [vmem:[%s3 + $0x190] sm:$0xff]
  %v447 = vld [vmem:[%s3 + $0x198] sm:$0xff]
  %v448 = vld [vmem:[%s3 + $0x1a0] sm:$0xff]
  %v449 = vld [vmem:[%s3 + $0x1a8] sm:$0xff]
  %v450 = vld [vmem:[%s3 + $0x1b0] sm:$0xff]
  %v451 = vld [vmem:[%s3 + $0x1b8] sm:$0xff]
  %v452 = vld [vmem:[%s3 + $0x1c0] sm:$0xff]
  %v453 = vld [vmem:[%s3 + $0x1c8] sm:$0xff]
  %v454 = vld [vmem:[%s3 + $0x1d0] sm:$0xff]
  %v455 = vld [vmem:[%s3 + $0x1d8] sm:$0xff]
  %v456 = vld [vmem:[%s3 + $0x1e0] sm:$0xff]
  %v457 = vld [vmem:[%s3 + $0x1e8] sm:$0xff]
  %v458 = vld [vmem:[%s3 + $0x1f0] sm:$0xff]
  %v459 = vld [vmem:[%s3 + $0x1f8] sm:$0xff]
  %v460 = vld [vmem:[%s4] sm:$0xff]
  %v461 = vld [vmem:[%s4 + $0x8] sm:$0xff]
  %v462 = vld [vmem:[%s4 + $0x10] sm:$0xff]
  %v463 = vld [vmem:[%s4 + $0x18] sm:$0xff]
  %v464 = vld [vmem:[%s4 + $0x20] sm:$0xff]
  %v465 = vld [vmem:[%s4 + $0x28] sm:$0xff]
  %v466 = vld [vmem:[%s4 + $0x30] sm:$0xff]
  %v467 = vld [vmem:[%s4 + $0x38] sm:$0xff]
  %v468 = vld [vmem:[%s4 + $0x40] sm:$0xff]
  %v469 = vld [vmem:[%s4 + $0x48] sm:$0xff]
  %v470 = vld [vmem:[%s4 + $0x50] sm:$0xff]
  %v471 = vld [vmem:[%s4 + $0x58] sm:$0xff]
  %v472 = vld [vmem:[%s4 + $0x60] sm:$0xff]
  %v473 = vld [vmem:[%s4 + $0x68] sm:$0xff]
  %v474 = vld [vmem:[%s4 + $0x70] sm:$0xff]
  %v475 = vld [vmem:[%s4 + $0x78] sm:$0xff]
  %v476 = vld [vmem:[%s4 + $0x80] sm:$0xff]
  %v477 = vld [vmem:[%s4 + $0x88] sm:$0xff]
  %v478 = vld [vmem:[%s4 + $0x90] sm:$0xff]
  %v479 = vld [vmem:[%s4 + $0x98] sm:$0xff]
  %v480 = vld [vmem:[%s4 + $0xa0] sm:$0xff]
  %v481 = vld [vmem:[%s4 + $0xa8] sm:$0xff]
  %v482 = vld [vmem:[%s4 + $0xb0] sm:$0xff]
  %v483 = vld [vmem:[%s4 + $0xb8] sm:$0xff]
  %v484 = vld [vmem:[%s4 + $0xc0] sm:$0xff]
  %v485 = vld [vmem:[%s4 + $0xc8] sm:$0xff]
  %v486 = vld [vmem:[%s4 + $0xd0] sm:$0xff]
  %v487 = vld [vmem:[%s4 + $0xd8] sm:$0xff]
  %v488 = vld [vmem:[%s4 + $0xe0] sm:$0xff]
  %v489 = vld [vmem:[%s4 + $0xe8] sm:$0xff]
  %v490 = vld [vmem:[%s4 + $0xf0] sm:$0xff]
  %v491 = vld [vmem:[%s4 + $0xf8] sm:$0xff]
  %v492 = vld [vmem:[%s4 + $0x100] sm:$0xff]
  %v493 = vld [vmem:[%s4 + $0x108] sm:$0xff]
  %v494 = vld [vmem:[%s4 + $0x110] sm:$0xff]
  %v495 = vld [vmem:[%s4 + $0x118] sm:$0xff]
  %v496 = vld [vmem:[%s4 + $0x120] sm:$0xff]
  %v497 = vld [vmem:[%s4 + $0x128] sm:$0xff]
  %v498 = vld [vmem:[%s4 + $0x130] sm:$0xff]
  %v499 = vld [vmem:[%s4 + $0x138] sm:$0xff]
  %v500 = vld [vmem:[%s4 + $0x140] sm:$0xff]
  %v501 = vld [vmem:[%s4 + $0x148] sm:$0xff]
  %v502 = vld [vmem:[%s4 + $0x150] sm:$0xff]
  %v503 = vld [vmem:[%s4 + $0x158] sm:$0xff]
  %v504 = vld [vmem:[%s4 + $0x160] sm:$0xff]
  %v505 = vld [vmem:[%s4 + $0x168] sm:$0xff]
  %v506 = vld [vmem:[%s4 + $0x170] sm:$0xff]
  %v507 = vld [vmem:[%s4 + $0x178] sm:$0xff]
  %v508 = vld [vmem:[%s4 + $0x180] sm:$0xff]
  %v509 = vld [vmem:[%s4 + $0x188] sm:$0xff]
  %v510 = vld [vmem:[%s4 + $0x190] sm:$0xff]
  %v511 = vld [vmem:[%s4 + $0x198] sm:$0xff]
  %v512 = vld [vmem:[%s4 + $0x1a0] sm:$0xff]
  %v513 = vld [vmem:[%s4 + $0x1a8] sm:$0xff]
  %v514 = vld [vmem:[%s4 + $0x1b0] sm:$0xff]
  %v515 = vld [vmem:[%s4 + $0x1b8] sm:$0xff]
  %v516 = vld [vmem:[%s4 + $0x1c0] sm:$0xff]
  %v517 = vld [vmem:[%s4 + $0x1c8] sm:$0xff]
  %v518 = vld [vmem:[%s4 + $0x1d0] sm:$0xff]
  %v519 = vld [vmem:[%s4 + $0x1d8] sm:$0xff]
  %v520 = vld [vmem:[%s4 + $0x1e0] sm:$0xff]
  %v521 = vld [vmem:[%s4 + $0x1e8] sm:$0xff]
  %v522 = vld [vmem:[%s4 + $0x1f0] sm:$0xff]
  %v523 = vld [vmem:[%s4 + $0x1f8] sm:$0xff]
  %524 = vmatprep.subr.mxu0 %v427
  %525 = vmatpush1.msra.mxu0 %v426
  %526 = vmatprep.subr.mxu0 %v425
  %527 = vmatpush1.msra.mxu0 %v424
  %528 = vmatprep.subr.mxu0 %v423
  %529 = vmatpush1.msra.mxu0 %v422
  %530 = vmatprep.subr.mxu0 %v421
  %531 = vmatpush1.msra.mxu0 %v420
  %532 = vmatprep.subr.mxu0 %v419
  %533 = vmatpush1.msra.mxu0 %v418
  %534 = vmatprep.subr.mxu0 %v417
  %535 = vmatpush1.msra.mxu0 %v416
  %536 = vmatprep.subr.mxu0 %v415
  %537 = vmatpush1.msra.mxu0 %v414
  %538 = vmatprep.subr.mxu0 %v413
  %539 = vmatpush1.msra.mxu0 %v412
  %540 = vmatprep.subr.mxu0 %v411
  %541 = vmatpush1.msra.mxu0 %v410
  %542 = vmatprep.subr.mxu0 %v409
  %543 = vmatpush1.msra.mxu0 %v408
  %544 = vmatprep.subr.mxu0 %v407
  %545 = vmatpush1.msra.mxu0 %v406
  %546 = vmatprep.subr.mxu0 %v405
  %547 = vmatpush1.msra.mxu0 %v404
  %548 = vmatprep.subr.mxu0 %v403
  %549 = vmatpush1.msra.mxu0 %v402
  %550 = vmatprep.subr.mxu0 %v401
  %551 = vmatpush1.msra.mxu0 %v400
  %552 = vmatprep.subr.mxu0 %v399
  %553 = vmatpush1.msra.mxu0 %v398
  %554 = vmatprep.subr.mxu0 %v397
  %555 = vmatpush1.msra.mxu0 %v396
  %556 = vmatprep.subr.mxu0 %v459
  %557 = vmatpush2.msra.mxu0 %v458
  %558 = vmatprep.subr.mxu0 %v457
  %559 = vmatpush2.msra.mxu0 %v456
  %560 = vmatprep.subr.mxu0 %v455
  %561 = vmatpush2.msra.mxu0 %v454
  %562 = vmatprep.subr.mxu0 %v453
  %563 = vmatpush2.msra.mxu0 %v452
  %564 = vmatprep.subr.mxu0 %v451
  %565 = vmatpush2.msra.mxu0 %v450
  %566 = vmatprep.subr.mxu0 %v449
  %567 = vmatpush2.msra.mxu0 %v448
  %568 = vmatprep.subr.mxu0 %v447
  %569 = vmatpush2.msra.mxu0 %v446
  %570 = vmatprep.subr.mxu0 %v445
  %571 = vmatpush2.msra.mxu0 %v444
  %572 = vmatprep.subr.mxu0 %v443
  %573 = vmatpush2.msra.mxu0 %v442
  %574 = vmatprep.subr.mxu0 %v441
  %575 = vmatpush2.msra.mxu0 %v440
  %576 = vmatprep.subr.mxu0 %v439
  %577 = vmatpush2.msra.mxu0 %v438
  %578 = vmatprep.subr.mxu0 %v437
  %579 = vmatpush2.msra.mxu0 %v436
  %580 = vmatprep.subr.mxu0 %v435
  %581 = vmatpush2.msra.mxu0 %v434
  %582 = vmatprep.subr.mxu0 %v433
  %583 = vmatpush2.msra.mxu0 %v432
  %584 = vmatprep.subr.mxu0 %v431
  %585 = vmatpush2.msra.mxu0 %v430
  %586 = vmatprep.subr.mxu0 %v429
  %587 = vmatpush2.msra.mxu0 %v428
  %588 = vmatprep.mubr.f32.mxu0 %v388
  %589 = vmatmul.mubr.f32.gmra.mxu0 %v386
  %v590 = vpop.f32.mrf.mxu0
  %v591 = vadd.f32 0.0, %v590
  %v592 = vpop.f32.mrf.mxu0
  %v593 = vadd.f32 0.0, %v592
  %594 = vdwg.mxu0
  %595 = vmatprep.subr.mxu0 %v491
  %596 = vmatpush1.msra.mxu0 %v490
  %597 = vmatprep.subr.mxu0 %v489
  %598 = vmatpush1.msra.mxu0 %v488
  %599 = vmatprep.subr.mxu0 %v487
  %600 = vmatpush1.msra.mxu0 %v486
  %601 = vmatprep.subr.mxu0 %v485
  %602 = vmatpush1.msra.mxu0 %v484
  %603 = vmatprep.subr.mxu0 %v483
  %604 = vmatpush1.msra.mxu0 %v482
  %605 = vmatprep.subr.mxu0 %v481
  %606 = vmatpush1.msra.mxu0 %v480
  %607 = vmatprep.subr.mxu0 %v479
  %608 = vmatpush1.msra.mxu0 %v478
  %609 = vmatprep.subr.mxu0 %v477
  %610 = vmatpush1.msra.mxu0 %v476
  %611 = vmatprep.subr.mxu0 %v475
  %612 = vmatpush1.msra.mxu0 %v474
  %613 = vmatprep.subr.mxu0 %v473
  %614 = vmatpush1.msra.mxu0 %v472
  %615 = vmatprep.subr.mxu0 %v471
  %616 = vmatpush1.msra.mxu0 %v470
  %617 = vmatprep.subr.mxu0 %v469
  %618 = vmatpush1.msra.mxu0 %v468
  %619 = vmatprep.subr.mxu0 %v467
  %620 = vmatpush1.msra.mxu0 %v466
  %621 = vmatprep.subr.mxu0 %v465
  %622 = vmatpush1.msra.mxu0 %v464
  %623 = vmatprep.subr.mxu0 %v463
  %624 = vmatpush1.msra.mxu0 %v462
  %625 = vmatprep.subr.mxu0 %v461
  %626 = vmatpush1.msra.mxu0 %v460
  %627 = vmatprep.subr.mxu0 %v523
  %628 = vmatpush2.msra.mxu0 %v522
  %629 = vmatprep.subr.mxu0 %v521
  %630 = vmatpush2.msra.mxu0 %v520
  %631 = vmatprep.subr.mxu0 %v519
  %632 = vmatpush2.msra.mxu0 %v518
  %633 = vmatprep.subr.mxu0 %v517
  %634 = vmatpush2.msra.mxu0 %v516
  %635 = vmatprep.subr.mxu0 %v515
  %636 = vmatpush2.msra.mxu0 %v514
  %637 = vmatprep.subr.mxu0 %v513
  %638 = vmatpush2.msra.mxu0 %v512
  %639 = vmatprep.subr.mxu0 %v511
  %640 = vmatpush2.msra.mxu0 %v510
  %641 = vmatprep.subr.mxu0 %v509
  %642 = vmatpush2.msra.mxu0 %v508
  %643 = vmatprep.subr.mxu0 %v507
  %644 = vmatpush2.msra.mxu0 %v506
  %645 = vmatprep.subr.mxu0 %v505
  %646 = vmatpush2.msra.mxu0 %v504
  %647 = vmatprep.subr.mxu0 %v503
  %648 = vmatpush2.msra.mxu0 %v502
  %649 = vmatprep.subr.mxu0 %v501
  %650 = vmatpush2.msra.mxu0 %v500
  %651 = vmatprep.subr.mxu0 %v499
  %652 = vmatpush2.msra.mxu0 %v498
  %653 = vmatprep.subr.mxu0 %v497
  %654 = vmatpush2.msra.mxu0 %v496
  %655 = vmatprep.subr.mxu0 %v495
  %656 = vmatpush2.msra.mxu0 %v494
  %657 = vmatprep.subr.mxu0 %v493
  %658 = vmatpush2.msra.mxu0 %v492
  %659 = vmatprep.mubr.f32.mxu0 %v394
  %660 = vmatmul.mubr.f32.gmra.mxu0 %v392
  %v661 = vpop.f32.mrf.mxu0
  %v662 = vadd.f32 0.0, %v661
  %v663 = vpop.f32.mrf.mxu0
  %v664 = vadd.f32 0.0, %v663
  %665 = vdwg.mxu0
  %v666 = vadd.f32 %v386, %v392
  %v667 = vadd.f32 %v388, %v394
  %v668 = vadd.f32 %v396, %v460
  %v669 = vadd.f32 %v397, %v461
  %v670 = vadd.f32 %v398, %v462
  %v671 = vadd.f32 %v399, %v463
  %v672 = vadd.f32 %v400, %v464
  %v673 = vadd.f32 %v401, %v465
  %v674 = vadd.f32 %v402, %v466
  %v675 = vadd.f32 %v403, %v467
  %v676 = vadd.f32 %v404, %v468
  %v677 = vadd.f32 %v405, %v469
  %v678 = vadd.f32 %v406, %v470
  %v679 = vadd.f32 %v407, %v471
  %v680 = vadd.f32 %v408, %v472
  %v681 = vadd.f32 %v409, %v473
  %v682 = vadd.f32 %v410, %v474
  %v683 = vadd.f32 %v411, %v475
  %v684 = vadd.f32 %v412, %v476
  %v685 = vadd.f32 %v413, %v477
  %v686 = vadd.f32 %v414, %v478
  %v687 = vadd.f32 %v415, %v479
  %v688 = vadd.f32 %v416, %v480
  %v689 = vadd.f32 %v417, %v481
  %v690 = vadd.f32 %v418, %v482
  %v691 = vadd.f32 %v419, %v483
  %v692 = vadd.f32 %v420, %v484
  %v693 = vadd.f32 %v421, %v485
  %v694 = vadd.f32 %v422, %v486
  %v695 = vadd.f32 %v423, %v487
  %v696 = vadd.f32 %v424, %v488
  %v697 = vadd.f32 %v425, %v489
  %v698 = vadd.f32 %v426, %v490
  %v699 = vadd.f32 %v427, %v491
  %v700 = vadd.f32 %v428, %v492
  %v701 = vadd.f32 %v429, %v493
  %v702 = vadd.f32 %v430, %v494
  %v703 = vadd.f32 %v431, %v495
  %v704 = vadd.f32 %v432, %v496
  %v705 = vadd.f32 %v433, %v497
  %v706 = vadd.f32 %v434, %v498
  %v707 = vadd.f32 %v435, %v499
  %v708 = vadd.f32 %v436, %v500
  %v709 = vadd.f32 %v437, %v501
  %v710 = vadd.f32 %v438, %v502
  %v711 = vadd.f32 %v439, %v503
  %v712 = vadd.f32 %v440, %v504
  %v713 = vadd.f32 %v441, %v505
  %v714 = vadd.f32 %v442, %v506
  %v715 = vadd.f32 %v443, %v507
  %v716 = vadd.f32 %v444, %v508
  %v717 = vadd.f32 %v445, %v509
  %v718 = vadd.f32 %v446, %v510
  %v719 = vadd.f32 %v447, %v511
  %v720 = vadd.f32 %v448, %v512
  %v721 = vadd.f32 %v449, %v513
  %v722 = vadd.f32 %v450, %v514
  %v723 = vadd.f32 %v451, %v515
  %v724 = vadd.f32 %v452, %v516
  %v725 = vadd.f32 %v453, %v517
  %v726 = vadd.f32 %v454, %v518
  %v727 = vadd.f32 %v455, %v519
  %v728 = vadd.f32 %v456, %v520
  %v729 = vadd.f32 %v457, %v521
  %v730 = vadd.f32 %v458, %v522
  %v731 = vadd.f32 %v459, %v523
  %732 = vmatprep.subr.mxu0 %v699
  %733 = vmatpush1.msra.mxu0 %v698
  %734 = vmatprep.subr.mxu0 %v697
  %735 = vmatpush1.msra.mxu0 %v696
  %736 = vmatprep.subr.mxu0 %v695
  %737 = vmatpush1.msra.mxu0 %v694
  %738 = vmatprep.subr.mxu0 %v693
  %739 = vmatpush1.msra.mxu0 %v692
  %740 = vmatprep.subr.mxu0 %v691
  %741 = vmatpush1.msra.mxu0 %v690
  %742 = vmatprep.subr.mxu0 %v689
  %743 = vmatpush1.msra.mxu0 %v688
  %744 = vmatprep.subr.mxu0 %v687
  %745 = vmatpush1.msra.mxu0 %v686
  %746 = vmatprep.subr.mxu0 %v685
  %747 = vmatpush1.msra.mxu0 %v684
  %748 = vmatprep.subr.mxu0 %v683
  %749 = vmatpush1.msra.mxu0 %v682
  %750 = vmatprep.subr.mxu0 %v681
  %751 = vmatpush1.msra.mxu0 %v680
  %752 = vmatprep.subr.mxu0 %v679
  %753 = vmatpush1.msra.mxu0 %v678
  %754 = vmatprep.subr.mxu0 %v677
  %755 = vmatpush1.msra.mxu0 %v676
  %756 = vmatprep.subr.mxu0 %v675
  %757 = vmatpush1.msra.mxu0 %v674
  %758 = vmatprep.subr.mxu0 %v673
  %759 = vmatpush1.msra.mxu0 %v672
  %760 = vmatprep.subr.mxu0 %v671
  %761 = vmatpush1.msra.mxu0 %v670
  %762 = vmatprep.subr.mxu0 %v669
  %763 = vmatpush1.msra.mxu0 %v668
  %764 = vmatprep.subr.mxu0 %v731
  %765 = vmatpush2.msra.mxu0 %v730
  %766 = vmatprep.subr.mxu0 %v729
  %767 = vmatpush2.msra.mxu0 %v728
  %768 = vmatprep.subr.mxu0 %v727
  %769 = vmatpush2.msra.mxu0 %v726
  %770 = vmatprep.subr.mxu0 %v725
  %771 = vmatpush2.msra.mxu0 %v724
  %772 = vmatprep.subr.mxu0 %v723
  %773 = vmatpush2.msra.mxu0 %v722
  %774 = vmatprep.subr.mxu0 %v721
  %775 = vmatpush2.msra.mxu0 %v720
  %776 = vmatprep.subr.mxu0 %v719
  %777 = vmatpush2.msra.mxu0 %v718
  %778 = vmatprep.subr.mxu0 %v717
  %779 = vmatpush2.msra.mxu0 %v716
  %780 = vmatprep.subr.mxu0 %v715
  %781 = vmatpush2.msra.mxu0 %v714
  %782 = vmatprep.subr.mxu0 %v713
  %783 = vmatpush2.msra.mxu0 %v712
  %784 = vmatprep.subr.mxu0 %v711
  %785 = vmatpush2.msra.mxu0 %v710
  %786 = vmatprep.subr.mxu0 %v709
  %787 = vmatpush2.msra.mxu0 %v708
  %788 = vmatprep.subr.mxu0 %v707
  %789 = vmatpush2.msra.mxu0 %v706
  %790 = vmatprep.subr.mxu0 %v705
  %791 = vmatpush2.msra.mxu0 %v704
  %792 = vmatprep.subr.mxu0 %v703
  %793 = vmatpush2.msra.mxu0 %v702
  %794 = vmatprep.subr.mxu0 %v701
  %795 = vmatpush2.msra.mxu0 %v700
  %796 = vmatprep.mubr.f32.mxu0 %v667
  %797 = vmatmul.mubr.f32.gmra.mxu0 %v666
  %v798 = vpop.f32.mrf.mxu0
  %v799 = vadd.f32 0.0, %v798
  %v800 = vpop.f32.mrf.mxu0
  %v801 = vadd.f32 0.0, %v800
  %802 = vdwg.mxu0
  %v803 = vsub.f32 %v591, %v662
  %v804 = vsub.f32 %v593, %v664
  %v805 = vsub.f32 %v799, %v591
  %v806 = vsub.f32 %v801, %v593
  %v807 = vsub.f32 %v805, %v662
  %v808 = vsub.f32 %v806, %v664
  %v809 = vmul.f32 %v803, %v803
  %v810 = vmul.f32 %v804, %v804
  %v811 = vmul.f32 %v807, %v807
  %v812 = vmul.f32 %v808, %v808
  %v813 = vadd.f32 %v809, %v811
  %v814 = vadd.f32 %v810, %v812
  %v815 = vrsqrt.pop %v813
  %v816 = vmul.f32 %v813, %v815
  %vm817 = vcmp.eq.f32.partialorder %v813, inf
  %v818 = vsel %vm817, %v813, %v816
  %vm819 = vcmp.eq.f32.partialorder %v813, 0.0
  %v820 = vand.u32 %v813, 2147483648
  %v821 = vsel %vm819, %v820, %v818
  %v822 = vrsqrt.pop %v814
  %v823 = vmul.f32 %v814, %v822
  %vm824 = vcmp.eq.f32.partialorder %v814, inf
  %v825 = vsel %vm824, %v814, %v823
  %vm826 = vcmp.eq.f32.partialorder %v814, 0.0
  %v827 = vand.u32 %v814, 2147483648
  %v828 = vsel %vm826, %v827, %v825
  %829 = vst [vmem:[%s7] sm:$0xff] %v821
  %830 = vst [vmem:[%s7 + $0x8] sm:$0xff] %v828
  // Predicated region
  $region30: #{_lambda_.4} parent=0 // pred_check
    _
  $region31: #{_lambda_.4} parent=0 // pred_check_branch
    %832 = sbr.rel (0) target = $region33
  $region32: #{_lambda_.4} parent=0 // pred_region
    _
  $region33: #{_lambda_.4} parent=0 // pred_fallthru
    _
  // Predicated region
  $region34: #{_lambda_.4} parent=0 // pred_check
    _
  $region35: #{_lambda_.4} parent=0 // pred_check_branch
    %834 = sbr.rel (0) target = $region37
  $region36: #{_lambda_.4} parent=0 // pred_region
    _
  $region37: #{_lambda_.4} parent=0 // pred_fallthru
    _

// kernel: reverse.0
$region0: #{reverse.0}
  %s0 = inlined_call_operand.vmem [shape: f32[2,1,16,7], index: 0, kind: input, shape index: {}]
  %s1 = inlined_call_operand.vmem [shape: f32[2,1,16,7], index: 1, kind: output, shape index: {}]
  $region1: #{reverse.0} parent=0
    #allocation0 [shape = 'u8[16384]{0}', space=vmem, size = 0x4000, scoped, tag = 'operand span for operand 0']
    #allocation1 [shape = 'u8[8192]{0}', space=vmem, size = 0x2000, scoped, tag = 'operand span for operand 1']
    %s2 = scalar_lea.vmem [#allocation0], 8
    // Predicated region
    $region2: #{reverse.0} parent=1 // pred_check
      _
    $region3: #{reverse.0} parent=1 // pred_check_branch
      %4 = sbr.rel (0) target = $region5
    $region4: #{reverse.0} parent=1 // pred_region
      // Predicated region
      $region6: #{reverse.0} parent=4 // pred_check
        _
      $region7: #{reverse.0} parent=4 // pred_check_branch
        %6 = sbr.rel (0) target = $region9
      $region8: #{reverse.0} parent=4 // pred_region
        // Predicated region
        $region21: #{reverse.0} parent=8 // pred_check
          _
        $region22: #{reverse.0} parent=8 // pred_check_branch
          %24 = sbr.rel (0) target = $region24
        $region23: #{reverse.0} parent=8 // pred_region
          loop: start=0, step=1, limit=1
          $region25: #{reverse.0} parent=23 // loop_pre_header
            _
          $region26: #{reverse.0} parent=23 // loop_header
            %s26 = sphi 0, %s30
            %p27 = scmp.ge.s32.totalorder %s26, 1
            %s31 = sphi %s0, %s0
            %s32 = sphi %s2, %s2
          $region27: #{reverse.0} parent=23 // loop_header_branch
            %29 = sbr.rel (%p27) target = $region31
          $region28: #{reverse.0} parent=23 // loop_body
            %v33 = vld [vmem:[%s31] sm:$0xff]
            %34 = vst [vmem:[%s32] sm:$0xff] %v33
            %v35 = vld [vmem:[%s31 + $0x8] sm:$0xff]
            %36 = vst [vmem:[%s32 + $0x10] sm:$0xff] %v35
          $region29: #{reverse.0} parent=23 // loop_footer
            %s30 = sadd.s32 1, %s26
          $region30: #{reverse.0} parent=23 // loop_footer_branch
            %25 = sbr.rel target = $region26
          $region31: #{reverse.0} parent=23 // loop_exit
            _
        $region24: #{reverse.0} parent=8 // pred_fallthru
          _
        // Predicated region
        $region32: #{reverse.0} parent=8 // pred_check
          _
        $region33: #{reverse.0} parent=8 // pred_check_branch
          %38 = sbr.rel target = $region35
        $region34: #{reverse.0} parent=8 // pred_region
          _
        $region35: #{reverse.0} parent=8 // pred_fallthru
          _
      $region9: #{reverse.0} parent=4 // pred_fallthru
        _
      // Predicated region
      $region10: #{reverse.0} parent=4 // pred_check
        _
      $region11: #{reverse.0} parent=4 // pred_check_branch
        %8 = sbr.rel target = $region13
      $region12: #{reverse.0} parent=4 // pred_region
        %s10 = ssub.s32 256, 1
        loop: start=0, step=1, limit=1
        $region14: #{reverse.0} parent=12 // loop_pre_header
          _
        $region15: #{reverse.0} parent=12 // loop_header
          %s12 = sphi 0, %s16
          %p13 = scmp.ge.s32.totalorder %s12, 1
          %s17 = sphi %s0, %s0
          %s18 = sphi %s2, %s2
        $region16: #{reverse.0} parent=12 // loop_header_branch
          %15 = sbr.rel (%p13) target = $region20
        $region17: #{reverse.0} parent=12 // loop_body
          %v19 = vld [vmem:[%s17] sm:%s10]
          %20 = vst [vmem:[%s18] sm:%s10] %v19
          %v21 = vld [vmem:[%s17 + $0x8] sm:%s10]
          %22 = vst [vmem:[%s18 + $0x10] sm:%s10] %v21
        $region18: #{reverse.0} parent=12 // loop_footer
          %s16 = sadd.s32 1, %s12
        $region19: #{reverse.0} parent=12 // loop_footer_branch
          %11 = sbr.rel target = $region15
        $region20: #{reverse.0} parent=12 // loop_exit
          _
      $region13: #{reverse.0} parent=4 // pred_fallthru
        _
    $region5: #{reverse.0} parent=1 // pred_fallthru
      _
    %39 = vnop
    %s40 = scalar_lea.vmem [#allocation0], 7
    %v41 = vld [vmem:[%s40] ss:$-1 sm:$0xff]
    %v42 = vrot.slane %v41, 1
    %43 = vst [vmem:[#allocation1] sm:$0xff] %v42
    %s44 = scalar_lea.vmem [#allocation0], 8
    %s45 = scalar_lea.vmem %s44, 7 [#allocation0]
    %v46 = vld [vmem:[%s45] ss:$-1 sm:$0xff]
    %v47 = vrot.slane %v46, 1
    %v48 = vlaneseq
    %v49 = vshrl.u32 %v48, 7
    %vm50 = vcmp.lt.s32.totalorder %v49, 7
    %51 = vst.msk [vmem:[#allocation1] sm:$0xff] %vm50, %v47
    %s52 = scalar_lea.vmem [#allocation1], 8
    %s53 = scalar_lea.vmem [#allocation0], 16
    %s54 = scalar_lea.vmem %s53, 7 [#allocation0]
    %v55 = vld [vmem:[%s54] ss:$-1 sm:$0xff]
    %v56 = vrot.slane %v55, 1
    %57 = vst [vmem:[%s52] sm:$0xff] %v56
    %s58 = scalar_lea.vmem %s53, 8 [#allocation0]
    %s59 = scalar_lea.vmem %s58, 7 [#allocation0]
    %v60 = vld [vmem:[%s59] ss:$-1 sm:$0xff]
    %v61 = vrot.slane %v60, 1
    %v62 = vlaneseq
    %v63 = vshrl.u32 %v62, 7
    %vm64 = vcmp.lt.s32.totalorder %v63, 7
    %65 = vst.msk [vmem:[%s52] sm:$0xff] %vm64, %v61
    // Predicated region
    $region36: #{reverse.0} parent=1 // pred_check
      _
    $region37: #{reverse.0} parent=1 // pred_check_branch
      %67 = sbr.rel (0) target = $region39
    $region38: #{reverse.0} parent=1 // pred_region
      // Predicated region
      $region40: #{reverse.0} parent=38 // pred_check
        _
      $region41: #{reverse.0} parent=38 // pred_check_branch
        %69 = sbr.rel (0) target = $region43
      $region42: #{reverse.0} parent=38 // pred_region
        // Predicated region
        $region55: #{reverse.0} parent=42 // pred_check
          _
        $region56: #{reverse.0} parent=42 // pred_check_branch
          %87 = sbr.rel (0) target = $region58
        $region57: #{reverse.0} parent=42 // pred_region
          loop: start=0, step=1, limit=1
          $region59: #{reverse.0} parent=57 // loop_pre_header
            _
          $region60: #{reverse.0} parent=57 // loop_header
            %s89 = sphi 0, %s93
            %p90 = scmp.ge.s32.totalorder %s89, 1
            %s94 = sphi [#allocation1], [#allocation1]
            %s95 = sphi %s1, %s1
          $region61: #{reverse.0} parent=57 // loop_header_branch
            %92 = sbr.rel (%p90) target = $region65
          $region62: #{reverse.0} parent=57 // loop_body
            %v96 = vld [vmem:[%s94] sm:$0xff]
            %97 = vst [vmem:[%s95] sm:$0xff] %v96
            %v98 = vld [vmem:[%s94 + $0x8] sm:$0xff]
            %99 = vst [vmem:[%s95 + $0x8] sm:$0xff] %v98
          $region63: #{reverse.0} parent=57 // loop_footer
            %s93 = sadd.s32 1, %s89
          $region64: #{reverse.0} parent=57 // loop_footer_branch
            %88 = sbr.rel target = $region60
          $region65: #{reverse.0} parent=57 // loop_exit
            _
        $region58: #{reverse.0} parent=42 // pred_fallthru
          _
        // Predicated region
        $region66: #{reverse.0} parent=42 // pred_check
          _
        $region67: #{reverse.0} parent=42 // pred_check_branch
          %101 = sbr.rel target = $region69
        $region68: #{reverse.0} parent=42 // pred_region
          _
        $region69: #{reverse.0} parent=42 // pred_fallthru
          _
      $region43: #{reverse.0} parent=38 // pred_fallthru
        _
      // Predicated region
      $region44: #{reverse.0} parent=38 // pred_check
        _
      $region45: #{reverse.0} parent=38 // pred_check_branch
        %71 = sbr.rel target = $region47
      $region46: #{reverse.0} parent=38 // pred_region
        %s73 = ssub.s32 256, 1
        loop: start=0, step=1, limit=1
        $region48: #{reverse.0} parent=46 // loop_pre_header
          _
        $region49: #{reverse.0} parent=46 // loop_header
          %s75 = sphi 0, %s79
          %p76 = scmp.ge.s32.totalorder %s75, 1
          %s80 = sphi [#allocation1], [#allocation1]
          %s81 = sphi %s1, %s1
        $region50: #{reverse.0} parent=46 // loop_header_branch
          %78 = sbr.rel (%p76) target = $region54
        $region51: #{reverse.0} parent=46 // loop_body
          %v82 = vld [vmem:[%s80] sm:%s73]
          %83 = vst [vmem:[%s81] sm:%s73] %v82
          %v84 = vld [vmem:[%s80 + $0x8] sm:%s73]
          %85 = vst [vmem:[%s81 + $0x8] sm:%s73] %v84
        $region52: #{reverse.0} parent=46 // loop_footer
          %s79 = sadd.s32 1, %s75
        $region53: #{reverse.0} parent=46 // loop_footer_branch
          %74 = sbr.rel target = $region49
        $region54: #{reverse.0} parent=46 // loop_exit
          _
      $region47: #{reverse.0} parent=38 // pred_fallthru
        _
    $region39: #{reverse.0} parent=1 // pred_fallthru
      _
    %102 = vnop

// kernel: _lambda_.3
$region0: #{_lambda_.3}
  #allocation0 [shape = 'u32[]', space=smem, size = 0x4, offset = 0x4, fixed_abs, tag = 'smem constant byte address 0x4 - core index']
  #allocation1 [shape = 'u32[144,128]{1,0:T(1,128)}', space=vmem, size = 0x12000, scoped, tag = 'internal scratch']
  %s0 = inlined_call_operand.vmem [shape: f32[2,8,290], index: 0, kind: input, shape index: {}]
  %s1 = inlined_call_operand.vmem [shape: f32[8,72], index: 1, kind: input, shape index: {}]
  %s2 = inlined_call_operand.vmem [shape: f32[8,1], index: 2, kind: input, shape index: {}]
  %s3 = inlined_call_operand.vmem [shape: f32[9,1,256], index: 3, kind: input, shape index: {}]
  %s4 = inlined_call_operand.vmem [shape: f32[8,512], index: 4, kind: output, shape index: {}]
  %s5 = sld [smem:[#allocation0]]
  $region26: #{_lambda_.3} parent=0
    _
  %s7 = ssub.s32 1, %s5
  %s8 = scalar_select 0, %s7, %s5
  // Predicated region
  $region2: #{_lambda_.3} parent=0 // pred_check
    _
  $region3: #{_lambda_.3} parent=0 // pred_check_branch
    %10 = sbr.rel (0) target = $region5
  $region4: #{_lambda_.3} parent=0 // pred_region
    _
  $region5: #{_lambda_.3} parent=0 // pred_fallthru
    _
  // Predicated region
  $region6: #{_lambda_.3} parent=0 // pred_check
    _
  $region7: #{_lambda_.3} parent=0 // pred_check_branch
    %12 = sbr.rel (0) target = $region9
  $region8: #{_lambda_.3} parent=0 // pred_region
    _
  $region9: #{_lambda_.3} parent=0 // pred_fallthru
    _
  // Predicated region
  $region10: #{_lambda_.3} parent=0 // pred_check
    _
  $region11: #{_lambda_.3} parent=0 // pred_check_branch
    %14 = sbr.rel (0) target = $region13
  $region12: #{_lambda_.3} parent=0 // pred_region
    _
  $region13: #{_lambda_.3} parent=0 // pred_fallthru
    _
  // Predicated region
  $region14: #{_lambda_.3} parent=0 // pred_check
    _
  $region15: #{_lambda_.3} parent=0 // pred_check_branch
    %16 = sbr.rel (0) target = $region17
  $region16: #{_lambda_.3} parent=0 // pred_region
    _
  $region17: #{_lambda_.3} parent=0 // pred_fallthru
    _
  %v17 = vld [vmem:[%s0] sm:$0xff]
  %v18 = vld [vmem:[%s0 + $0x8] sm:$0xff]
  %v19 = vld [vmem:[%s0 + $0x10] sm:$0xff]
  %v20 = vld [vmem:[%s0 + $0x18] sm:$0xff]
  %v21 = vld [vmem:[%s0 + $0x20] sm:$0xff]
  %v22 = vld [vmem:[%s0 + $0x28] sm:$0xff]
  %v23 = vld [vmem:[%s3] sm:$0x3]
  %v25 = vlaneseq
  %v26 = vshrl.u32 %v25, 7
  %v27 = vsub.s32 0, %v26
  %v28 = vrot.slane %v23, %v27
  %v29 = vlaneseq
  %v30 = vshrl.u32 %v29, 7
  %v31 = vsub.s32 1, %v30
  %v32 = vrot.slane %v23, %v31
  %v35 = vmul.f32 %v17, %v28
  %v36 = vmul.f32 %v18, %v32
  %v37 = vmul.f32 %v20, %v28
  %v38 = vmul.f32 %v21, %v32
  %s39 = scalar_lea.vmem %s3, 2
  %v40 = vld [vmem:[%s39] sm:$0x3]
  %v42 = vlaneseq
  %v43 = vshrl.u32 %v42, 7
  %v44 = vsub.s32 0, %v43
  %v45 = vrot.slane %v40, %v44
  %v46 = vlaneseq
  %v47 = vshrl.u32 %v46, 7
  %v48 = vsub.s32 1, %v47
  %v49 = vrot.slane %v40, %v48
  %50 = vrot.lane.b32.xlu0 %v45, 1
  %v51 = vpop.permute.xlu0 %50
  %52 = vrot.lane.b32.xlu0 %v49, 1
  %v53 = vpop.permute.xlu0 %52
  %vm54 = vcmask 7168
  %v55 = vsel %vm54, %v51, %v53
  %v59 = vmul.f32 %v17, %v51
  %v60 = vmul.f32 %v18, %v55
  %v61 = vmul.f32 %v19, %v53
  %v62 = vmul.f32 %v20, %v51
  %v63 = vmul.f32 %v21, %v55
  %v64 = vmul.f32 %v22, %v53
  %68 = vrot.lane.b32.xlu0 %v59, 127
  %v69 = vpop.permute.xlu0 %68
  %70 = vrot.lane.b32.xlu0 %v60, 127
  %v71 = vpop.permute.xlu0 %70
  %72 = vrot.lane.b32.xlu0 %v61, 127
  %v73 = vpop.permute.xlu0 %72
  %vm74 = vcmask 1039360
  %v75 = vsel %vm74, %v69, %v71
  %v76 = vsel %vm74, %v71, %v73
  %82 = vrot.lane.b32.xlu0 %v62, 127
  %v83 = vpop.permute.xlu0 %82
  %84 = vrot.lane.b32.xlu0 %v63, 127
  %v85 = vpop.permute.xlu0 %84
  %86 = vrot.lane.b32.xlu0 %v64, 127
  %v87 = vpop.permute.xlu0 %86
  %v88 = vsel %vm74, %v83, %v85
  %v89 = vsel %vm74, %v85, %v87
  %s92 = scalar_lea.vmem %s3, 4
  %v93 = vld [vmem:[%s92] sm:$0x3]
  %v95 = vlaneseq
  %v96 = vshrl.u32 %v95, 7
  %v97 = vsub.s32 0, %v96
  %v98 = vrot.slane %v93, %v97
  %v99 = vlaneseq
  %v100 = vshrl.u32 %v99, 7
  %v101 = vsub.s32 1, %v100
  %v102 = vrot.slane %v93, %v101
  %103 = vrot.lane.b32.xlu0 %v98, 2
  %v104 = vpop.permute.xlu0 %103
  %105 = vrot.lane.b32.xlu0 %v102, 2
  %v106 = vpop.permute.xlu0 %105
  %vm107 = vcmask 15360
  %v108 = vsel %vm107, %v104, %v106
  %v112 = vmul.f32 %v17, %v104
  %v113 = vmul.f32 %v18, %v108
  %v114 = vmul.f32 %v19, %v106
  %v115 = vmul.f32 %v20, %v104
  %v116 = vmul.f32 %v21, %v108
  %v117 = vmul.f32 %v22, %v106
  %121 = vrot.lane.b32.xlu0 %v112, 126
  %v122 = vpop.permute.xlu0 %121
  %123 = vrot.lane.b32.xlu0 %v113, 126
  %v124 = vpop.permute.xlu0 %123
  %125 = vrot.lane.b32.xlu0 %v114, 126
  %v126 = vpop.permute.xlu0 %125
  %vm127 = vcmask 1031168
  %v128 = vsel %vm127, %v122, %v124
  %v129 = vsel %vm127, %v124, %v126
  %135 = vrot.lane.b32.xlu0 %v115, 126
  %v136 = vpop.permute.xlu0 %135
  %137 = vrot.lane.b32.xlu0 %v116, 126
  %v138 = vpop.permute.xlu0 %137
  %139 = vrot.lane.b32.xlu0 %v117, 126
  %v140 = vpop.permute.xlu0 %139
  %v141 = vsel %vm127, %v136, %v138
  %v142 = vsel %vm127, %v138, %v140
  %s145 = scalar_lea.vmem %s3, 6
  %v146 = vld [vmem:[%s145] sm:$0x3]
  %v148 = vlaneseq
  %v149 = vshrl.u32 %v148, 7
  %v150 = vsub.s32 0, %v149
  %v151 = vrot.slane %v146, %v150
  %v152 = vlaneseq
  %v153 = vshrl.u32 %v152, 7
  %v154 = vsub.s32 1, %v153
  %v155 = vrot.slane %v146, %v154
  %156 = vrot.lane.b32.xlu0 %v151, 16
  %v157 = vpop.permute.xlu0 %156
  %158 = vrot.lane.b32.xlu0 %v155, 16
  %v159 = vpop.permute.xlu0 %158
  %vm160 = vcmask 130048
  %v161 = vsel %vm160, %v157, %v159
  %v165 = vmul.f32 %v17, %v157
  %v166 = vmul.f32 %v18, %v161
  %v167 = vmul.f32 %v19, %v159
  %v168 = vmul.f32 %v20, %v157
  %v169 = vmul.f32 %v21, %v161
  %v170 = vmul.f32 %v22, %v159
  %174 = vrot.lane.b32.xlu0 %v165, 112
  %v175 = vpop.permute.xlu0 %174
  %176 = vrot.lane.b32.xlu0 %v166, 112
  %v177 = vpop.permute.xlu0 %176
  %178 = vrot.lane.b32.xlu0 %v167, 112
  %v179 = vpop.permute.xlu0 %178
  %vm180 = vcmask 916480
  %v181 = vsel %vm180, %v175, %v177
  %v182 = vsel %vm180, %v177, %v179
  %188 = vrot.lane.b32.xlu0 %v168, 112
  %v189 = vpop.permute.xlu0 %188
  %190 = vrot.lane.b32.xlu0 %v169, 112
  %v191 = vpop.permute.xlu0 %190
  %192 = vrot.lane.b32.xlu0 %v170, 112
  %v193 = vpop.permute.xlu0 %192
  %v194 = vsel %vm180, %v189, %v191
  %v195 = vsel %vm180, %v191, %v193
  %s198 = scalar_lea.vmem %s3, 8
  %v199 = vld [vmem:[%s198] sm:$0x3]
  %v201 = vlaneseq
  %v202 = vshrl.u32 %v201, 7
  %v203 = vsub.s32 0, %v202
  %v204 = vrot.slane %v199, %v203
  %v205 = vlaneseq
  %v206 = vshrl.u32 %v205, 7
  %v207 = vsub.s32 1, %v206
  %v208 = vrot.slane %v199, %v207
  %209 = vrot.lane.b32.xlu0 %v204, 17
  %v210 = vpop.permute.xlu0 %209
  %211 = vrot.lane.b32.xlu0 %v208, 17
  %v212 = vpop.permute.xlu0 %211
  %vm213 = vcmask 138240
  %v214 = vsel %vm213, %v210, %v212
  %v218 = vmul.f32 %v17, %v210
  %v219 = vmul.f32 %v18, %v214
  %v220 = vmul.f32 %v19, %v212
  %v221 = vmul.f32 %v20, %v210
  %v222 = vmul.f32 %v21, %v214
  %v223 = vmul.f32 %v22, %v212
  %227 = vrot.lane.b32.xlu0 %v218, 111
  %v228 = vpop.permute.xlu0 %227
  %229 = vrot.lane.b32.xlu0 %v219, 111
  %v230 = vpop.permute.xlu0 %229
  %231 = vrot.lane.b32.xlu0 %v220, 111
  %v232 = vpop.permute.xlu0 %231
  %vm233 = vcmask 908288
  %v234 = vsel %vm233, %v228, %v230
  %v235 = vsel %vm233, %v230, %v232
  %241 = vrot.lane.b32.xlu0 %v221, 111
  %v242 = vpop.permute.xlu0 %241
  %243 = vrot.lane.b32.xlu0 %v222, 111
  %v244 = vpop.permute.xlu0 %243
  %245 = vrot.lane.b32.xlu0 %v223, 111
  %v246 = vpop.permute.xlu0 %245
  %v247 = vsel %vm233, %v242, %v244
  %v248 = vsel %vm233, %v244, %v246
  %s251 = scalar_lea.vmem %s3, 10
  %v252 = vld [vmem:[%s251] sm:$0x3]
  %v254 = vlaneseq
  %v255 = vshrl.u32 %v254, 7
  %v256 = vsub.s32 0, %v255
  %v257 = vrot.slane %v252, %v256
  %v258 = vlaneseq
  %v259 = vshrl.u32 %v258, 7
  %v260 = vsub.s32 1, %v259
  %v261 = vrot.slane %v252, %v260
  %262 = vrot.lane.b32.xlu0 %v257, 18
  %v263 = vpop.permute.xlu0 %262
  %264 = vrot.lane.b32.xlu0 %v261, 18
  %v265 = vpop.permute.xlu0 %264
  %vm266 = vcmask 146432
  %v267 = vsel %vm266, %v263, %v265
  %v271 = vmul.f32 %v17, %v263
  %v272 = vmul.f32 %v18, %v267
  %v273 = vmul.f32 %v19, %v265
  %v274 = vmul.f32 %v20, %v263
  %v275 = vmul.f32 %v21, %v267
  %v276 = vmul.f32 %v22, %v265
  %280 = vrot.lane.b32.xlu0 %v271, 110
  %v281 = vpop.permute.xlu0 %280
  %282 = vrot.lane.b32.xlu0 %v272, 110
  %v283 = vpop.permute.xlu0 %282
  %284 = vrot.lane.b32.xlu0 %v273, 110
  %v285 = vpop.permute.xlu0 %284
  %vm286 = vcmask 900096
  %v287 = vsel %vm286, %v281, %v283
  %v288 = vsel %vm286, %v283, %v285
  %294 = vrot.lane.b32.xlu0 %v274, 110
  %v295 = vpop.permute.xlu0 %294
  %296 = vrot.lane.b32.xlu0 %v275, 110
  %v297 = vpop.permute.xlu0 %296
  %298 = vrot.lane.b32.xlu0 %v276, 110
  %v299 = vpop.permute.xlu0 %298
  %v300 = vsel %vm286, %v295, %v297
  %v301 = vsel %vm286, %v297, %v299
  %s304 = scalar_lea.vmem %s3, 12
  %v305 = vld [vmem:[%s304] sm:$0x3]
  %v307 = vlaneseq
  %v308 = vshrl.u32 %v307, 7
  %v309 = vsub.s32 0, %v308
  %v310 = vrot.slane %v305, %v309
  %v311 = vlaneseq
  %v312 = vshrl.u32 %v311, 7
  %v313 = vsub.s32 1, %v312
  %v314 = vrot.slane %v305, %v313
  %315 = vrot.lane.b32.xlu0 %v310, 32
  %v316 = vpop.permute.xlu0 %315
  %317 = vrot.lane.b32.xlu0 %v314, 32
  %v318 = vpop.permute.xlu0 %317
  %vm319 = vcmask 261120
  %v320 = vsel %vm319, %v316, %v318
  %v324 = vmul.f32 %v17, %v316
  %v325 = vmul.f32 %v18, %v320
  %v326 = vmul.f32 %v19, %v318
  %v327 = vmul.f32 %v20, %v316
  %v328 = vmul.f32 %v21, %v320
  %v329 = vmul.f32 %v22, %v318
  %333 = vrot.lane.b32.xlu0 %v324, 96
  %v334 = vpop.permute.xlu0 %333
  %335 = vrot.lane.b32.xlu0 %v325, 96
  %v336 = vpop.permute.xlu0 %335
  %337 = vrot.lane.b32.xlu0 %v326, 96
  %v338 = vpop.permute.xlu0 %337
  %vm339 = vcmask 785408
  %v340 = vsel %vm339, %v334, %v336
  %v341 = vsel %vm339, %v336, %v338
  %347 = vrot.lane.b32.xlu0 %v327, 96
  %v348 = vpop.permute.xlu0 %347
  %349 = vrot.lane.b32.xlu0 %v328, 96
  %v350 = vpop.permute.xlu0 %349
  %351 = vrot.lane.b32.xlu0 %v329, 96
  %v352 = vpop.permute.xlu0 %351
  %v353 = vsel %vm339, %v348, %v350
  %v354 = vsel %vm339, %v350, %v352
  %s357 = scalar_lea.vmem %s3, 14
  %v358 = vld [vmem:[%s357] sm:$0x3]
  %v360 = vlaneseq
  %v361 = vshrl.u32 %v360, 7
  %v362 = vsub.s32 0, %v361
  %v363 = vrot.slane %v358, %v362
  %v364 = vlaneseq
  %v365 = vshrl.u32 %v364, 7
  %v366 = vsub.s32 1, %v365
  %v367 = vrot.slane %v358, %v366
  %368 = vrot.lane.b32.xlu0 %v363, 33
  %v369 = vpop.permute.xlu0 %368
  %370 = vrot.lane.b32.xlu0 %v367, 33
  %v371 = vpop.permute.xlu0 %370
  %vm372 = vcmask 269312
  %v373 = vsel %vm372, %v369, %v371
  %v377 = vmul.f32 %v17, %v369
  %v378 = vmul.f32 %v18, %v373
  %v379 = vmul.f32 %v19, %v371
  %v380 = vmul.f32 %v20, %v369
  %v381 = vmul.f32 %v21, %v373
  %v382 = vmul.f32 %v22, %v371
  %386 = vrot.lane.b32.xlu0 %v377, 95
  %v387 = vpop.permute.xlu0 %386
  %388 = vrot.lane.b32.xlu0 %v378, 95
  %v389 = vpop.permute.xlu0 %388
  %390 = vrot.lane.b32.xlu0 %v379, 95
  %v391 = vpop.permute.xlu0 %390
  %vm392 = vcmask 777216
  %v393 = vsel %vm392, %v387, %v389
  %v394 = vsel %vm392, %v389, %v391
  %400 = vrot.lane.b32.xlu0 %v380, 95
  %v401 = vpop.permute.xlu0 %400
  %402 = vrot.lane.b32.xlu0 %v381, 95
  %v403 = vpop.permute.xlu0 %402
  %404 = vrot.lane.b32.xlu0 %v382, 95
  %v405 = vpop.permute.xlu0 %404
  %v406 = vsel %vm392, %v401, %v403
  %v407 = vsel %vm392, %v403, %v405
  %s410 = scalar_lea.vmem %s3, 16
  %v411 = vld [vmem:[%s410] sm:$0x3]
  %v413 = vlaneseq
  %v414 = vshrl.u32 %v413, 7
  %v415 = vsub.s32 0, %v414
  %v416 = vrot.slane %v411, %v415
  %v417 = vlaneseq
  %v418 = vshrl.u32 %v417, 7
  %v419 = vsub.s32 1, %v418
  %v420 = vrot.slane %v411, %v419
  %421 = vrot.lane.b32.xlu0 %v416, 34
  %v422 = vpop.permute.xlu0 %421
  %423 = vrot.lane.b32.xlu0 %v420, 34
  %v424 = vpop.permute.xlu0 %423
  %vm425 = vcmask 277504
  %v426 = vsel %vm425, %v422, %v424
  %v430 = vmul.f32 %v17, %v422
  %v431 = vmul.f32 %v18, %v426
  %v432 = vmul.f32 %v19, %v424
  %v433 = vmul.f32 %v20, %v422
  %v434 = vmul.f32 %v21, %v426
  %v435 = vmul.f32 %v22, %v424
  %439 = vrot.lane.b32.xlu0 %v430, 94
  %v440 = vpop.permute.xlu0 %439
  %441 = vrot.lane.b32.xlu0 %v431, 94
  %v442 = vpop.permute.xlu0 %441
  %443 = vrot.lane.b32.xlu0 %v432, 94
  %v444 = vpop.permute.xlu0 %443
  %vm445 = vcmask 769024
  %v446 = vsel %vm445, %v440, %v442
  %v447 = vsel %vm445, %v442, %v444
  %453 = vrot.lane.b32.xlu0 %v433, 94
  %v454 = vpop.permute.xlu0 %453
  %455 = vrot.lane.b32.xlu0 %v434, 94
  %v456 = vpop.permute.xlu0 %455
  %457 = vrot.lane.b32.xlu0 %v435, 94
  %v458 = vpop.permute.xlu0 %457
  %v459 = vsel %vm445, %v454, %v456
  %v460 = vsel %vm445, %v456, %v458
  %v463 = vld [vmem:[%s1] sm:$0xff]
  %v464 = vld [vmem:[%s2] sm:$0xff]
  %466 = vset.pattern.permute.xlu0 0
  %467 = vperm.xlu0 %466, %v464
  %v468 = vpop.permute.xlu0 %467
  %vm470 = vcmask 588800
  %v472 = vsel %vm470, %v463, 0
  %474 = vmatprep.subr.mxu0 0.0
  %475 = vmatpush1.msra.mxu0 0.0
  %476 = vmatprep.subr.mxu0 0.0
  %477 = vmatpush1.msra.mxu0 0.0
  %478 = vmatprep.subr.mxu0 0.0
  %479 = vmatpush1.msra.mxu0 0.0
  %480 = vmatprep.subr.mxu0 0.0
  %481 = vmatpush1.msra.mxu0 0.0
  %482 = vmatprep.subr.mxu0 0.0
  %483 = vmatpush1.msra.mxu0 0.0
  %484 = vmatprep.subr.mxu0 0.0
  %485 = vmatpush1.msra.mxu0 0.0
  %486 = vmatprep.subr.mxu0 0.0
  %487 = vmatpush1.msra.mxu0 0.0
  %488 = vmatprep.subr.mxu0 %v447
  %489 = vmatpush1.msra.mxu0 %v446
  %490 = vmatprep.subr.mxu0 %v394
  %491 = vmatpush1.msra.mxu0 %v393
  %492 = vmatprep.subr.mxu0 %v341
  %493 = vmatpush1.msra.mxu0 %v340
  %494 = vmatprep.subr.mxu0 %v288
  %495 = vmatpush1.msra.mxu0 %v287
  %496 = vmatprep.subr.mxu0 %v235
  %497 = vmatpush1.msra.mxu0 %v234
  %498 = vmatprep.subr.mxu0 %v182
  %499 = vmatpush1.msra.mxu0 %v181
  %500 = vmatprep.subr.mxu0 %v129
  %501 = vmatpush1.msra.mxu0 %v128
  %502 = vmatprep.subr.mxu0 %v76
  %503 = vmatpush1.msra.mxu0 %v75
  %504 = vmatprep.subr.mxu0 %v36
  %505 = vmatpush1.msra.mxu0 %v35
  %506 = vmatprep.subr.mxu0 0.0
  %507 = vmatpush2.msra.mxu0 0.0
  %508 = vmatprep.subr.mxu0 0.0
  %509 = vmatpush2.msra.mxu0 0.0
  %510 = vmatprep.subr.mxu0 0.0
  %511 = vmatpush2.msra.mxu0 0.0
  %512 = vmatprep.subr.mxu0 0.0
  %513 = vmatpush2.msra.mxu0 0.0
  %514 = vmatprep.subr.mxu0 0.0
  %515 = vmatpush2.msra.mxu0 0.0
  %516 = vmatprep.subr.mxu0 0.0
  %517 = vmatpush2.msra.mxu0 0.0
  %518 = vmatprep.subr.mxu0 0.0
  %519 = vmatpush2.msra.mxu0 0.0
  %520 = vmatprep.subr.mxu0 0.0
  %521 = vmatpush2.msra.mxu0 0.0
  %522 = vmatprep.subr.mxu0 0.0
  %523 = vmatpush2.msra.mxu0 0.0
  %524 = vmatprep.subr.mxu0 0.0
  %525 = vmatpush2.msra.mxu0 0.0
  %526 = vmatprep.subr.mxu0 0.0
  %527 = vmatpush2.msra.mxu0 0.0
  %528 = vmatprep.subr.mxu0 0.0
  %529 = vmatpush2.msra.mxu0 0.0
  %530 = vmatprep.subr.mxu0 0.0
  %531 = vmatpush2.msra.mxu0 0.0
  %532 = vmatprep.subr.mxu0 0.0
  %533 = vmatpush2.msra.mxu0 0.0
  %534 = vmatprep.subr.mxu0 0.0
  %535 = vmatpush2.msra.mxu0 0.0
  %536 = vmatprep.subr.mxu0 0.0
  %537 = vmatpush2.msra.mxu0 0.0
  %538 = vmatprep.mubr.f32.mxu0 0.0
  %539 = vmatmul.mubr.f32.gmra.mxu0 %v472
  %v540 = vpop.f32.mrf.mxu0
  %v541 = vadd.f32 %v468, %v540
  %v542 = vpop.f32.mrf.mxu0
  %v543 = vadd.f32 %v468, %v542
  %544 = vdwg.mxu0
  %545 = vmatprep.subr.mxu0 0.0
  %546 = vmatpush1.msra.mxu0 0.0
  %547 = vmatprep.subr.mxu0 0.0
  %548 = vmatpush1.msra.mxu0 0.0
  %549 = vmatprep.subr.mxu0 0.0
  %550 = vmatpush1.msra.mxu0 0.0
  %551 = vmatprep.subr.mxu0 0.0
  %552 = vmatpush1.msra.mxu0 0.0
  %553 = vmatprep.subr.mxu0 0.0
  %554 = vmatpush1.msra.mxu0 0.0
  %555 = vmatprep.subr.mxu0 0.0
  %556 = vmatpush1.msra.mxu0 0.0
  %557 = vmatprep.subr.mxu0 0.0
  %558 = vmatpush1.msra.mxu0 0.0
  %559 = vmatprep.subr.mxu0 %v460
  %560 = vmatpush1.msra.mxu0 %v459
  %561 = vmatprep.subr.mxu0 %v407
  %562 = vmatpush1.msra.mxu0 %v406
  %563 = vmatprep.subr.mxu0 %v354
  %564 = vmatpush1.msra.mxu0 %v353
  %565 = vmatprep.subr.mxu0 %v301
  %566 = vmatpush1.msra.mxu0 %v300
  %567 = vmatprep.subr.mxu0 %v248
  %568 = vmatpush1.msra.mxu0 %v247
  %569 = vmatprep.subr.mxu0 %v195
  %570 = vmatpush1.msra.mxu0 %v194
  %571 = vmatprep.subr.mxu0 %v142
  %572 = vmatpush1.msra.mxu0 %v141
  %573 = vmatprep.subr.mxu0 %v89
  %574 = vmatpush1.msra.mxu0 %v88
  %575 = vmatprep.subr.mxu0 %v38
  %576 = vmatpush1.msra.mxu0 %v37
  %577 = vmatprep.subr.mxu0 0.0
  %578 = vmatpush2.msra.mxu0 0.0
  %579 = vmatprep.subr.mxu0 0.0
  %580 = vmatpush2.msra.mxu0 0.0
  %581 = vmatprep.subr.mxu0 0.0
  %582 = vmatpush2.msra.mxu0 0.0
  %583 = vmatprep.subr.mxu0 0.0
  %584 = vmatpush2.msra.mxu0 0.0
  %585 = vmatprep.subr.mxu0 0.0
  %586 = vmatpush2.msra.mxu0 0.0
  %587 = vmatprep.subr.mxu0 0.0
  %588 = vmatpush2.msra.mxu0 0.0
  %589 = vmatprep.subr.mxu0 0.0
  %590 = vmatpush2.msra.mxu0 0.0
  %591 = vmatprep.subr.mxu0 0.0
  %592 = vmatpush2.msra.mxu0 0.0
  %593 = vmatprep.subr.mxu0 0.0
  %594 = vmatpush2.msra.mxu0 0.0
  %595 = vmatprep.subr.mxu0 0.0
  %596 = vmatpush2.msra.mxu0 0.0
  %597 = vmatprep.subr.mxu0 0.0
  %598 = vmatpush2.msra.mxu0 0.0
  %599 = vmatprep.subr.mxu0 0.0
  %600 = vmatpush2.msra.mxu0 0.0
  %601 = vmatprep.subr.mxu0 0.0
  %602 = vmatpush2.msra.mxu0 0.0
  %603 = vmatprep.subr.mxu0 0.0
  %604 = vmatpush2.msra.mxu0 0.0
  %605 = vmatprep.subr.mxu0 0.0
  %606 = vmatpush2.msra.mxu0 0.0
  %607 = vmatprep.subr.mxu0 0.0
  %608 = vmatpush2.msra.mxu0 0.0
  %609 = vmatprep.mubr.f32.mxu0 0.0
  %610 = vmatmul.mubr.f32.gmra.mxu0 %v472
  %v611 = vpop.f32.mrf.mxu0
  %v612 = vadd.f32 %v468, %v611
  %v613 = vpop.f32.mrf.mxu0
  %v614 = vadd.f32 %v468, %v613
  %615 = vdwg.mxu0
  %616 = vst [vmem:[%s4] sm:$0xff] %v541
  %617 = vst [vmem:[%s4 + $0x8] sm:$0xff] %v543
  %618 = vst [vmem:[%s4 + $0x10] sm:$0xff] %v612
  %619 = vst [vmem:[%s4 + $0x18] sm:$0xff] %v614
  // Predicated region
  $region18: #{_lambda_.3} parent=0 // pred_check
    _
  $region19: #{_lambda_.3} parent=0 // pred_check_branch
    %621 = sbr.rel (0) target = $region21
  $region20: #{_lambda_.3} parent=0 // pred_region
    _
  $region21: #{_lambda_.3} parent=0 // pred_fallthru
    _
  // Predicated region
  $region22: #{_lambda_.3} parent=0 // pred_check
    _
  $region23: #{_lambda_.3} parent=0 // pred_check_branch
    %623 = sbr.rel (0) target = $region25
  $region24: #{_lambda_.3} parent=0 // pred_region
    _
  $region25: #{_lambda_.3} parent=0 // pred_fallthru
    _

</llo_original>
